<compile_context>
chip_gen: v6e
topology: v6e:2x2x1
jax: 0.10.0
libtpu: 0.0.40
codegen_flags: <defaults>
</compile_context>

<pallas_src>
import functools

import jax
import jax.numpy as jnp
from jax.experimental import pallas as pl
from jax.experimental.pallas import tpu as pltpu


_NEG_BIG = -1e30  # masks padded vocab columns before softmax (exp -> 0)


# --------------------------------------------------------------------------
# Kernels
# --------------------------------------------------------------------------
def _masked_softmax(logits, v_out):
    """Row softmax over a (-1e30)-padded lane axis; returns first v_out cols."""
    m = jnp.max(logits, axis=-1, keepdims=True)
    e = jnp.exp(logits - m)
    denom = jnp.sum(e, axis=-1, keepdims=True)
    return (e / denom)[..., :v_out]


def _additive_kernel(encl_ref, decl_ref, out_ref, *, v_out):
    # encl_ref: (1, tT, Vp) f32 = enc @ W + bias  (padded columns hold -1e30)
    # decl_ref: (1, tU, Vp) f32 = dec @ W         (padded columns hold 0)
    # out_ref:  (1, tT, tU, V)
    logits = encl_ref[0][:, None, :] + decl_ref[0][None, :, :]   # (tT, tU, Vp)
    out_ref[0] = _masked_softmax(logits, v_out).astype(out_ref.dtype)


def _multiplicative_kernel(enc_ref, dec_ref, w_ref, b_ref, out_ref, *, v_out):
    # enc_ref: (1, tT, D), dec_ref: (1, tU, D)
    # w_ref:   (D, Vp)     b_ref: (1, Vp) f32 (padded columns hold -1e30)
    # out_ref: (1, tT, tU, V)
    enc = enc_ref[0]
    dec = dec_ref[0]
    w = w_ref[...]
    bias = b_ref[...].astype(jnp.float32)

    tT, D = enc.shape
    tU = dec.shape[0]
    Vp = w.shape[1]

    # Per-tile join; tU is a multiple of 8 (or == U) so the reshape is a
    # sublane merge rather than a relayout copy.
    joined = (enc[:, None, :] * dec[None, :, :]).reshape(tT * tU, D)
    logits = (jnp.dot(joined, w, preferred_element_type=jnp.float32)
              + bias).reshape(tT, tU, Vp)
    out_ref[0] = _masked_softmax(logits, v_out).astype(out_ref.dtype)


# --------------------------------------------------------------------------
# Tiling / VMEM heuristics
# --------------------------------------------------------------------------
def _round_up(x, m):
    return (x + m - 1) // m * m


def _vmem_budget_bytes():
    """Usable scoped-VMEM budget: physical capacity minus compiler headroom."""
    try:
        cap = int(pltpu.get_tpu_info().vmem_capacity_bytes)
    except Exception:
        cap = 64 << 20                        # conservative (v7x-sized) fallback
    cap = max(cap, 16 << 20)
    # v7x (64 MiB phys) -> ~52 MiB usable; v5e/v6e (128 MiB phys) -> ~112 MiB.
    return cap - max(12 << 20, cap // 8)


def _dim_candidates(full):
    cands = [full] if full <= 512 else []
    for t in (512, 256, 128, 64, 32, 16, 8):
        if t < full:
            cands.append(t)
    return cands or [full]


def _pick_tiles(T, U, footprint, budget):
    """Largest (tT, tU) (each %8==0 or == full dim) whose per-tile VMEM
    footprint fits ~60% of the usable budget; prefers balanced tiles."""
    target = int(budget * 0.6)
    best_key, best = None, None
    for tT in _dim_candidates(T):
        for tU in _dim_candidates(U):
            fp = footprint(tT, tU)
            if fp > target:
                continue
            key = (tT * tU, -abs(tT - tU), -fp)
            if best_key is None or key > best_key:
                best_key, best = key, (tT, tU)
    if best is None:      # even the smallest legal tiles exceed the target
        best = (_dim_candidates(T)[-1], _dim_candidates(U)[-1])
    return best


# --------------------------------------------------------------------------
# Forward wrapper
# --------------------------------------------------------------------------
def joiner_forward(enc, dec, weight_t, bias, *, mode="multiplicative",
                   out_dtype=None, compute_dtype=None, tiles=None):
    """enc: (B,T,D), dec: (B,U,D), weight_t: (D,V), bias: (V,) -> (B,T,U,V)."""
    if mode not in ("multiplicative", "additive"):
        raise ValueError(f"unknown mode {mode!r}")

    B, T, D = enc.shape
    _, U, _ = dec.shape
    V = weight_t.shape[1]
    out_dtype = enc.dtype if out_dtype is None else out_dtype
    out_isz = jnp.dtype(out_dtype).itemsize

    # Lane-dense vocab: pad V up to a multiple of 128. Padded weight columns
    # are 0 and padded bias entries are -1e30, so padded logits vanish under
    # softmax; only the first V columns are ever written back to HBM.
    Vp = max(128, _round_up(V, 128))
    if Vp != V:
        weight_p = jnp.pad(weight_t, ((0, 0), (0, Vp - V)))
        bias_p = jnp.pad(bias.astype(jnp.float32), (0, Vp - V),
                         constant_values=_NEG_BIG)
    else:
        weight_p = weight_t
        bias_p = bias.astype(jnp.float32)

    budget = _vmem_budget_bytes()
    grid_semantics = ("parallel", "parallel", "parallel")

    if mode == "additive":
        # Factor the linear layer: (enc + dec)@W + b == (enc@W + b) + dec@W.
        # The two small matmuls run once as plain XLA ops; the Pallas kernel
        # does only the O(B*T*U*V) broadcast-add + softmax, with no weight
        # resident in VMEM and no per-tile enc@W / dec@W recompute.
        enc_logits = jnp.einsum("btd,dv->btv", enc, weight_p,
                                preferred_element_type=jnp.float32) + bias_p
        dec_logits = jnp.einsum("bud,dv->buv", dec, weight_p,
                                preferred_element_type=jnp.float32)

        def footprint(tT, tU):
            return (2 * (tT + tU) * Vp * 4          # double-buffered logit tiles
                    + 3 * tT * tU * Vp * 4          # joined logits / exp / probs
                    + 2 * tT * tU * V * out_isz)    # double-buffered output tile

        tT, tU = tiles if tiles is not None else _pick_tiles(T, U, footprint, budget)
        vmem_limit = int(min(budget,
                             max(footprint(tT, tU) * 3 // 2 + (4 << 20), 16 << 20)))

        kernel = functools.partial(_additive_kernel, v_out=V)
        return pl.pallas_call(
            kernel,
            out_shape=jax.ShapeDtypeStruct((B, T, U, V), out_dtype),
            grid_spec=pltpu.PrefetchScalarGridSpec(
                num_scalar_prefetch=0,
                grid=(B, pl.cdiv(T, tT), pl.cdiv(U, tU)),
                in_specs=[
                    pl.BlockSpec((1, tT, Vp), lambda b, i, j: (b, i, 0)),
                    pl.BlockSpec((1, tU, Vp), lambda b, i, j: (b, j, 0)),
                ],
                out_specs=pl.BlockSpec((1, tT, tU, V),
                                       lambda b, i, j: (b, i, j, 0)),
            ),
            compiler_params=pltpu.CompilerParams(
                dimension_semantics=grid_semantics,
                vmem_limit_bytes=vmem_limit),
        )(enc_logits, dec_logits)

    # ---------------- multiplicative mode ----------------
    if compute_dtype is not None:          # e.g. bf16 for native MXU rate
        enc = enc.astype(compute_dtype)
        dec = dec.astype(compute_dtype)
        weight_p = weight_p.astype(compute_dtype)
    in_isz = jnp.dtype(enc.dtype).itemsize
    w_isz = jnp.dtype(weight_p.dtype).itemsize
    bias2d = bias_p.reshape(1, Vp)

    def footprint(tT, tU):
        return (2 * (tT + tU) * D * in_isz          # double-buffered enc/dec tiles
                + D * Vp * w_isz + Vp * 4           # resident weight (1 buf) + bias
                + tT * tU * D * in_isz              # joined temp
                + 3 * tT * tU * Vp * 4              # logits / exp / probs temps
                + 2 * tT * tU * V * out_isz)        # double-buffered output tile

    tT, tU = tiles if tiles is not None else _pick_tiles(T, U, footprint, budget)
    vmem_limit = int(min(budget,
                         max(footprint(tT, tU) * 3 // 2 + (4 << 20), 16 << 20)))

    def call(single_buffer_weight):
        const_kwargs = {}
        if single_buffer_weight:
            # Constant index_map: double-buffering the weight/bias buys nothing;
            # single-buffering reclaims D*Vp bytes of VMEM (matters on v7x).
            const_kwargs = dict(pipeline_mode=pl.Buffered(1))
        kernel = functools.partial(_multiplicative_kernel, v_out=V)
        return pl.pallas_call(
            kernel,
            out_shape=jax.ShapeDtypeStruct((B, T, U, V), out_dtype),
            grid_spec=pltpu.PrefetchScalarGridSpec(
                num_scalar_prefetch=0,
                grid=(B, pl.cdiv(T, tT), pl.cdiv(U, tU)),
                in_specs=[
                    pl.BlockSpec((1, tT, D), lambda b, i, j: (b, i, 0)),
                    pl.BlockSpec((1, tU, D), lambda b, i, j: (b, j, 0)),
                    pl.BlockSpec((D, Vp), lambda b, i, j: (0, 0), **const_kwargs),
                    pl.BlockSpec((1, Vp), lambda b, i, j: (0, 0), **const_kwargs),
                ],
                out_specs=pl.BlockSpec((1, tT, tU, V),
                                       lambda b, i, j: (b, i, j, 0)),
            ),
            compiler_params=pltpu.CompilerParams(
                dimension_semantics=grid_semantics,
                vmem_limit_bytes=vmem_limit),
        )(enc, dec, weight_p, bias2d)

    try:
        return call(single_buffer_weight=hasattr(pl, "Buffered"))
    except Exception:
        # Fallback: default (double) buffering if Buffered(1) is unsupported.
        return call(single_buffer_weight=False)


# --------------------------------------------------------------------------
# Pure-JAX reference and self-test
# --------------------------------------------------------------------------
def joiner_reference(enc, dec, weight_t, bias, *, mode="multiplicative"):
    e = enc[:, :, None, :]
    d = dec[:, None, :, :]
    joined = e * d if mode == "multiplicative" else e + d
    logits = jnp.einsum("btud,dv->btuv", joined, weight_t) + bias
    return jax.nn.softmax(logits, axis=-1)


if __name__ == "__main__":
    key = jax.random.PRNGKey(0)

    def make_inputs(k, B, T, U, D, V):
        k_enc, k_dec, k_w, k_b = jax.random.split(k, 4)
        enc = jax.random.normal(k_enc, (B, T, D), dtype=jnp.float32)
        dec = jax.random.normal(k_dec, (B, U, D), dtype=jnp.float32)
        # nn.Linear(D, V): weight (V, D), bias (V). Stored transposed (D, V).
        bound = 1.0 / (D ** 0.5)
        weight_t = jax.random.uniform(k_w, (D, V), jnp.float32, -bound, bound)
        bias = jax.random.uniform(k_b, (V,), jnp.float32, -bound, bound)
        return enc, dec, weight_t, bias

    configs = [
        # (B, T, U, hidden_size, V, tiles) -- D = 2 * hidden_size per module.
        (2, 8, 8, 16, 16, None),        # single-tile grid, V << 128 (padded)
        (2, 24, 16, 32, 40, (8, 8)),    # multi-tile (b, i, j) grid, padded V
    ]
    for B, T, U, hidden, V, tiles in configs:
        D = 2 * hidden
        key, sub = jax.random.split(key)
        enc, dec, weight_t, bias = make_inputs(sub, B, T, U, D, V)
        for mode in ("multiplicative", "additive"):
            out = joiner_forward(enc, dec, weight_t, bias, mode=mode, tiles=tiles)
            out = jax.block_until_ready(out)
            ref = joiner_reference(enc, dec, weight_t, bias, mode=mode)
            assert out.shape == (B, T, U, V), (mode, out.shape)
            assert jnp.allclose(out, ref, atol=1e-4, rtol=1e-4), (mode, B, T, U, V)
            assert jnp.allclose(out.sum(-1), 1.0, atol=1e-4), (mode, B, T, U, V)

    print("KERNEL_OK")
</pallas_src>

<mosaic_0001>
module attributes {stable_mosaic.version = 11 : i64} {
  func.func @_multiplicative_kernel(%arg0: i32, %arg1: i32, %arg2: i32, %arg3: memref<1x8x32xf32, #tpu.memory_space<vmem>>, %arg4: memref<1x8x32xf32, #tpu.memory_space<vmem>>, %arg5: memref<32x128xf32, #tpu.memory_space<vmem>>, %arg6: memref<1x128xf32, #tpu.memory_space<vmem>>, %arg7: memref<1x8x8x16xf32, #tpu.memory_space<vmem>>) attributes {dimension_semantics = [#tpu.dimension_semantics<parallel>, #tpu.dimension_semantics<parallel>, #tpu.dimension_semantics<parallel>], iteration_bounds = array<i64: 2, 1, 1>, scalar_prefetch = 0 : i64, scratch_operands = 0 : i64, tpu.core_type = #tpu.core_type<tc>, window_params = [{transform_indices = @transform_0, window_bounds = array<i64: 1, 8, 32>}, {transform_indices = @transform_1, window_bounds = array<i64: 1, 8, 32>}, {pipeline_mode = #tpu.pipeline_mode<synchronous>, transform_indices = @transform_2, window_bounds = array<i64: 32, 128>}, {pipeline_mode = #tpu.pipeline_mode<synchronous>, transform_indices = @transform_3, window_bounds = array<i64: 1, 128>}, {transform_indices = @transform_4, window_bounds = array<i64: 1, 8, 8, 16>}]} {
    %c0 = arith.constant 0 : index
    %c0_0 = arith.constant 0 : index
    %c0_1 = arith.constant 0 : index
    %0 = vector.load %arg3[%c0, %c0_0, %c0_1] : memref<1x8x32xf32, #tpu.memory_space<vmem>>, vector<1x8x32xf32>
    %1 = vector.shape_cast %0 : vector<1x8x32xf32> to vector<8x32xf32>
    %c0_2 = arith.constant 0 : index
    %c0_3 = arith.constant 0 : index
    %c0_4 = arith.constant 0 : index
    %2 = vector.load %arg4[%c0_2, %c0_3, %c0_4] : memref<1x8x32xf32, #tpu.memory_space<vmem>>, vector<1x8x32xf32>
    %3 = vector.shape_cast %2 : vector<1x8x32xf32> to vector<8x32xf32>
    %c0_5 = arith.constant 0 : index
    %c0_6 = arith.constant 0 : index
    %4 = vector.load %arg5[%c0_5, %c0_6] : memref<32x128xf32, #tpu.memory_space<vmem>>, vector<32x128xf32>
    %c0_7 = arith.constant 0 : index
    %c0_8 = arith.constant 0 : index
    %5 = vector.load %arg6[%c0_7, %c0_8] : memref<1x128xf32, #tpu.memory_space<vmem>>, vector<1x128xf32>
    %6 = vector.shape_cast %1 : vector<8x32xf32> to vector<8x1x32xf32>
    %7 = vector.shape_cast %3 : vector<8x32xf32> to vector<1x8x32xf32>
    %8 = vector.broadcast %6 : vector<8x1x32xf32> to vector<8x8x32xf32>
    %9 = vector.broadcast %7 : vector<1x8x32xf32> to vector<8x8x32xf32>
    %10 = arith.mulf %8, %9 : vector<8x8x32xf32>
    %11 = vector.shape_cast %10 : vector<8x8x32xf32> to vector<64x32xf32>
    %cst = arith.constant dense<0.000000e+00> : vector<64x128xf32>
    %12 = tpu.matmul %11, %4, %cst {dimension_numbers = #tpu.dot_dimension_numbers<[1], [0], [0], [1], [0, 0, 1, 1], [], []>} : vector<64x32xf32>, vector<32x128xf32>, vector<64x128xf32> -> vector<64x128xf32>
    %13 = vector.broadcast %5 : vector<1x128xf32> to vector<64x128xf32>
    %14 = arith.addf %12, %13 : vector<64x128xf32>
    %15 = vector.shape_cast %14 : vector<64x128xf32> to vector<8x8x128xf32>
    %cst_9 = arith.constant dense<0xFF800000> : vector<8x8xf32>
    %16 = vector.multi_reduction <maximumf>, %15, %cst_9 [2] : vector<8x8x128xf32> to vector<8x8xf32>
    %17 = vector.shape_cast %16 : vector<8x8xf32> to vector<8x8x1xf32>
    %18 = vector.broadcast %17 : vector<8x8x1xf32> to vector<8x8x128xf32>
    %19 = arith.subf %15, %18 : vector<8x8x128xf32>
    %20 = math.exp %19 : vector<8x8x128xf32>
    %cst_10 = arith.constant dense<0.000000e+00> : vector<8x8xf32>
    %21 = vector.multi_reduction <add>, %20, %cst_10 [2] : vector<8x8x128xf32> to vector<8x8xf32>
    %22 = vector.shape_cast %21 : vector<8x8xf32> to vector<8x8x1xf32>
    %23 = vector.broadcast %22 : vector<8x8x1xf32> to vector<8x8x128xf32>
    %24 = arith.divf %20, %23 : vector<8x8x128xf32>
    %25 = vector.extract_strided_slice %24 {offsets = [0, 0, 0], sizes = [8, 8, 16], strides = [1, 1, 1]} : vector<8x8x128xf32> to vector<8x8x16xf32>
    %c0_11 = arith.constant 0 : index
    %c0_12 = arith.constant 0 : index
    %c0_13 = arith.constant 0 : index
    %c0_14 = arith.constant 0 : index
    %26 = vector.load %arg7[%c0_11, %c0_12, %c0_13, %c0_14] : memref<1x8x8x16xf32, #tpu.memory_space<vmem>>, vector<1x8x8x16xf32>
    %27 = vector.shape_cast %26 : vector<1x8x8x16xf32> to vector<8x8x16xf32>
    %28 = vector.shape_cast %25 : vector<8x8x16xf32> to vector<1x8x8x16xf32>
    tpu.vector_store %arg7[%c0_11, %c0_12, %c0_13, %c0_14], %28 {strides = array<i32>} : memref<1x8x8x16xf32, #tpu.memory_space<vmem>>, vector<1x8x8x16xf32>,
    return
  }
  func.func @transform_0(%arg0: i32, %arg1: i32, %arg2: i32) -> (i32, i32, i32) {
    %c0_i32 = arith.constant 0 : i32
    %c0_i32_0 = arith.constant 0 : i32
    return %arg0, %arg1, %c0_i32 : i32, i32, i32
  }
  func.func @transform_1(%arg0: i32, %arg1: i32, %arg2: i32) -> (i32, i32, i32) {
    %c0_i32 = arith.constant 0 : i32
    %c0_i32_0 = arith.constant 0 : i32
    return %arg0, %arg2, %c0_i32 : i32, i32, i32
  }
  func.func @transform_2(%arg0: i32, %arg1: i32, %arg2: i32) -> (i32, i32) {
    %c0_i32 = arith.constant 0 : i32
    %c0_i32_0 = arith.constant 0 : i32
    %c0_i32_1 = arith.constant 0 : i32
    return %c0_i32, %c0_i32_0 : i32, i32
  }
  func.func @transform_3(%arg0: i32, %arg1: i32, %arg2: i32) -> (i32, i32) {
    %c0_i32 = arith.constant 0 : i32
    %c0_i32_0 = arith.constant 0 : i32
    %c0_i32_1 = arith.constant 0 : i32
    return %c0_i32, %c0_i32_0 : i32, i32
  }
  func.func @transform_4(%arg0: i32, %arg1: i32, %arg2: i32) -> (i32, i32, i32, i32) {
    %c0_i32 = arith.constant 0 : i32
    %c0_i32_0 = arith.constant 0 : i32
    return %arg0, %arg1, %arg2, %c0_i32 : i32, i32, i32, i32
  }
}

module attributes {stable_mosaic.version = 11 : i64} {
  func.func @_multiplicative_kernel(%arg0: i32, %arg1: i32, %arg2: i32, %arg3: memref<1x8x32xf32, #tpu.memory_space<vmem>>, %arg4: memref<1x8x32xf32, #tpu.memory_space<vmem>>, %arg5: memref<32x128xf32, #tpu.memory_space<vmem>>, %arg6: memref<1x128xf32, #tpu.memory_space<vmem>>, %arg7: memref<1x8x8x16xf32, #tpu.memory_space<vmem>>) attributes {dimension_semantics = [#tpu.dimension_semantics<parallel>, #tpu.dimension_semantics<parallel>, #tpu.dimension_semantics<parallel>], iteration_bounds = array<i64: 2, 1, 1>, scalar_prefetch = 0 : i64, scratch_operands = 0 : i64, tpu.core_type = #tpu.core_type<tc>, window_params = [{transform_indices = @transform_0, window_bounds = array<i64: 1, 8, 32>}, {transform_indices = @transform_1, window_bounds = array<i64: 1, 8, 32>}, {pipeline_mode = #tpu.pipeline_mode<synchronous>, transform_indices = @transform_2, window_bounds = array<i64: 32, 128>}, {pipeline_mode = #tpu.pipeline_mode<synchronous>, transform_indices = @transform_3, window_bounds = array<i64: 1, 128>}, {transform_indices = @transform_4, window_bounds = array<i64: 1, 8, 8, 16>}]} {
    %c0 = arith.constant 0 : index
    %c0_0 = arith.constant 0 : index
    %c0_1 = arith.constant 0 : index
    %0 = vector.load %arg3[%c0, %c0_0, %c0_1] : memref<1x8x32xf32, #tpu.memory_space<vmem>>, vector<1x8x32xf32>
    %1 = vector.shape_cast %0 : vector<1x8x32xf32> to vector<8x32xf32>
    %c0_2 = arith.constant 0 : index
    %c0_3 = arith.constant 0 : index
    %c0_4 = arith.constant 0 : index
    %2 = vector.load %arg4[%c0_2, %c0_3, %c0_4] : memref<1x8x32xf32, #tpu.memory_space<vmem>>, vector<1x8x32xf32>
    %3 = vector.shape_cast %2 : vector<1x8x32xf32> to vector<8x32xf32>
    %c0_5 = arith.constant 0 : index
    %c0_6 = arith.constant 0 : index
    %4 = vector.load %arg5[%c0_5, %c0_6] : memref<32x128xf32, #tpu.memory_space<vmem>>, vector<32x128xf32>
    %c0_7 = arith.constant 0 : index
    %c0_8 = arith.constant 0 : index
    %5 = vector.load %arg6[%c0_7, %c0_8] : memref<1x128xf32, #tpu.memory_space<vmem>>, vector<1x128xf32>
    %6 = vector.shape_cast %1 : vector<8x32xf32> to vector<8x1x32xf32>
    %7 = vector.shape_cast %3 : vector<8x32xf32> to vector<1x8x32xf32>
    %8 = vector.broadcast %6 : vector<8x1x32xf32> to vector<8x8x32xf32>
    %9 = vector.broadcast %7 : vector<1x8x32xf32> to vector<8x8x32xf32>
    %10 = arith.mulf %8, %9 : vector<8x8x32xf32>
    %11 = vector.shape_cast %10 : vector<8x8x32xf32> to vector<64x32xf32>
    %cst = arith.constant dense<0.000000e+00> : vector<64x128xf32>
    %12 = tpu.matmul %11, %4, %cst {dimension_numbers = #tpu.dot_dimension_numbers<[1], [0], [0], [1], [0, 0, 1, 1], [], []>} : vector<64x32xf32>, vector<32x128xf32>, vector<64x128xf32> -> vector<64x128xf32>
    %13 = vector.broadcast %5 : vector<1x128xf32> to vector<64x128xf32>
    %14 = arith.addf %12, %13 : vector<64x128xf32>
    %15 = vector.shape_cast %14 : vector<64x128xf32> to vector<8x8x128xf32>
    %cst_9 = arith.constant dense<0xFF800000> : vector<8x8xf32>
    %16 = vector.multi_reduction <maximumf>, %15, %cst_9 [2] : vector<8x8x128xf32> to vector<8x8xf32>
    %17 = vector.shape_cast %16 : vector<8x8xf32> to vector<8x8x1xf32>
    %18 = vector.broadcast %17 : vector<8x8x1xf32> to vector<8x8x128xf32>
    %19 = arith.subf %15, %18 : vector<8x8x128xf32>
    %20 = math.exp %19 : vector<8x8x128xf32>
    %cst_10 = arith.constant dense<0.000000e+00> : vector<8x8xf32>
    %21 = vector.multi_reduction <add>, %20, %cst_10 [2] : vector<8x8x128xf32> to vector<8x8xf32>
    %22 = vector.shape_cast %21 : vector<8x8xf32> to vector<8x8x1xf32>
    %23 = vector.broadcast %22 : vector<8x8x1xf32> to vector<8x8x128xf32>
    %24 = arith.divf %20, %23 : vector<8x8x128xf32>
    %25 = vector.extract_strided_slice %24 {offsets = [0, 0, 0], sizes = [8, 8, 16], strides = [1, 1, 1]} : vector<8x8x128xf32> to vector<8x8x16xf32>
    %c0_11 = arith.constant 0 : index
    %c0_12 = arith.constant 0 : index
    %c0_13 = arith.constant 0 : index
    %c0_14 = arith.constant 0 : index
    %26 = vector.load %arg7[%c0_11, %c0_12, %c0_13, %c0_14] : memref<1x8x8x16xf32, #tpu.memory_space<vmem>>, vector<1x8x8x16xf32>
    %27 = vector.shape_cast %26 : vector<1x8x8x16xf32> to vector<8x8x16xf32>
    %28 = vector.shape_cast %25 : vector<8x8x16xf32> to vector<1x8x8x16xf32>
    tpu.vector_store %arg7[%c0_11, %c0_12, %c0_13, %c0_14], %28 {strides = array<i32>} : memref<1x8x8x16xf32, #tpu.memory_space<vmem>>, vector<1x8x8x16xf32>,
    return
  }
  func.func @transform_0(%arg0: i32, %arg1: i32, %arg2: i32) -> (i32, i32, i32) {
    %c0_i32 = arith.constant 0 : i32
    %c0_i32_0 = arith.constant 0 : i32
    return %arg0, %arg1, %c0_i32 : i32, i32, i32
  }
  func.func @transform_1(%arg0: i32, %arg1: i32, %arg2: i32) -> (i32, i32, i32) {
    %c0_i32 = arith.constant 0 : i32
    %c0_i32_0 = arith.constant 0 : i32
    return %arg0, %arg2, %c0_i32 : i32, i32, i32
  }
  func.func @transform_2(%arg0: i32, %arg1: i32, %arg2: i32) -> (i32, i32) {
    %c0_i32 = arith.constant 0 : i32
    %c0_i32_0 = arith.constant 0 : i32
    %c0_i32_1 = arith.constant 0 : i32
    return %c0_i32, %c0_i32_0 : i32, i32
  }
  func.func @transform_3(%arg0: i32, %arg1: i32, %arg2: i32) -> (i32, i32) {
    %c0_i32 = arith.constant 0 : i32
    %c0_i32_0 = arith.constant 0 : i32
    %c0_i32_1 = arith.constant 0 : i32
    return %c0_i32, %c0_i32_0 : i32, i32
  }
  func.func @transform_4(%arg0: i32, %arg1: i32, %arg2: i32) -> (i32, i32, i32, i32) {
    %c0_i32 = arith.constant 0 : i32
    %c0_i32_0 = arith.constant 0 : i32
    return %arg0, %arg1, %arg2, %c0_i32 : i32, i32, i32, i32
  }
}

</mosaic_0001>

<llo_original>
// kernel: tpu_custom_call.1
$region0: #{tpu_custom_call.1}
  #allocation0 [shape = 'u32[]', space=smem, size = 0x4, offset = 0x4, fixed_abs, tag = 'smem constant byte address 0x4 - core index']
  #allocation1 [shape = 'u32[144,128]{1,0:T(1,128)}', space=vmem, size = 0x12000, scoped, tag = 'internal scratch']
  %s0 = inlined_call_operand.hbm [shape: f32[2,8,32], index: 0, kind: input, shape index: {}]
  %s1 = inlined_call_operand.hbm [shape: f32[2,8,32], index: 1, kind: input, shape index: {}]
  %s2 = inlined_call_operand.hbm [shape: f32[32,128], index: 2, kind: input, shape index: {}]
  %s3 = inlined_call_operand.vmem [shape: f32[1,128], index: 3, kind: input, shape index: {}]
  %s4 = inlined_call_operand.hbm [shape: f32[2,8,8,16], index: 4, kind: output, shape index: {}]
  %s5 = sld [smem:[#allocation0]]
  $region61: #{tpu_custom_call.1} parent=0
    _
  %s7 = ssub.s32 1, %s5
  %s8 = scalar_select 0, %s7, %s5
  $region1: #{tpu_custom_call.1} parent=0
    #allocation2 [shape = 'u8[8192]{0}', space=vmem, size = 0x2000, scoped, tag = 'input window, operand 0']
    #allocation3 [shape = 's32[2]{0}', space=sflag, size = 0x8, scoped, tag = 'scoped memory for tpu_custom_call.1']
    #allocation4 [shape = 's32[2]{0}', space=sflag, size = 0x8, scoped, tag = 'scoped memory for tpu_custom_call.1']
    #allocation5 [shape = 'u8[8192]{0}', space=vmem, size = 0x2000, scoped, tag = 'input window, operand 1']
    #allocation6 [shape = 's32[2]{0}', space=sflag, size = 0x8, scoped, tag = 'scoped memory for tpu_custom_call.1']
    #allocation7 [shape = 'u8[16384]{0}', space=vmem, size = 0x4000, scoped, tag = 'input window, operand 2, single buffered']
    #allocation8 [shape = 'u8[65536]{0}', space=vmem, size = 0x10000, scoped, tag = 'output window, operand 0']
    %9 = vsyncpa [#allocation3], 0
    %s10 = scalar_lea.sflag [#allocation3], 1
    %11 = vsyncpa %s10, 0
    %12 = vsyncpa [#allocation6], 0
    %s13 = scalar_lea.sflag [#allocation6], 1
    %14 = vsyncpa %s13, 0
    %15 = vsyncpa [#allocation4], 0
    %s16 = scalar_lea.sflag [#allocation4], 1
    %17 = vsyncpa %s16, 0
    loop: start=0, step=1, limit=4
    $region2: #{tpu_custom_call.1} parent=1 // loop_pre_header
      _
    $region3: #{tpu_custom_call.1} parent=1 // loop_header
      %s19 = sphi 0, %s23
      %p20 = scmp.ge.s32.totalorder %s19, 4
      %s26 = sphi 0, %s45
      %s27 = sphi 0, %s41
      %s28 = sphi 0, %s37
      %s29 = sphi 0, %s26
      %s30 = sphi 0, %s27
      %s31 = sphi 0, %s28
      %s32 = sphi 0, %s29
      %s33 = sphi 0, %s30
      %s34 = sphi 0, %s31
      %s50 = sphi 0, %s52
      %s53 = sphi 0, %s50
      %s54 = sphi 0, %s53
      %s70 = sphi 0, %s54
      %s78 = sphi 0, %s80
      %s81 = sphi 0, %s78
      %s82 = sphi 0, %s81
      %s98 = sphi 0, %s82
      %s102 = sphi 0, %s102
      %s104 = sphi 0, %s102
      %s105 = sphi 0, %s104
      %s119 = sphi 0, %s105
      %s123 = sphi 0, %s123
      %s125 = sphi 0, %s123
      %s126 = sphi 0, %s125
      %s140 = sphi 0, %s126
      %s150 = sphi 0, %s152
      %s153 = sphi 0, %s150
      %s154 = sphi 0, %s153
      %s170 = sphi 0, %s154
    $region4: #{tpu_custom_call.1} parent=1 // loop_header_branch
      %22 = sbr.rel (%p20) target = $region8
    $region5: #{tpu_custom_call.1} parent=1 // loop_body
      %s24 = ssub.s32 %s19, 1
      %s25 = ssub.s32 %s19, 2
      %s35 = sadd.s32 1, %s28
      %p36 = scmp.ge.s32.totalorder %s35, 1
      %s37 = scalar_select %p36, 0, %s35
      %s38 = sadd.s32 1, %s27
      %s39 = scalar_select %p36, %s38, %s27
      %p40 = scmp.ge.s32.totalorder %s39, 1
      %s41 = scalar_select %p40, 0, %s39
      %s42 = sadd.s32 1, %s26
      %s43 = scalar_select %p40, %s42, %s26
      %p44 = scmp.ge.s32.totalorder %s43, 2
      %s45 = scalar_select %p44, 0, %s43
      %s46 = ssub.s32 %s26, %s45
      %s47 = ssub.s32 %s27, %s41
      %s48 = sor.u32 %s46, %s47
      %p49 = scmp.eq.s32.totalorder %s48, 0
      %s51 = sadd.s32 %s50, 1
      %s52 = scalar_select %p49, %s50, %s51
      %p55 = pneg %p49
      %p56 = scmp.eq.s32.totalorder %s19, 1
      %p57 = por %p55, %p56
      %p58 = scmp.ne.s32.totalorder %s50, %s53
      %p59 = scmp.eq.s32.totalorder %s19, 0
      %p60 = por %p58, %p59
      %p61 = scmp.ne.s32.totalorder %s50, %s53
      %p62 = scmp.eq.s32.totalorder %s24, 1
      %p63 = por %p61, %p62
      %p64 = scmp.ne.s32.totalorder %s53, %s54
      %p65 = scmp.eq.s32.totalorder %s24, 0
      %p66 = por %p64, %p65
      %p67 = scmp.ne.s32.totalorder %s53, %s54
      %p68 = scmp.eq.s32.totalorder %s25, 1
      %p69 = por %p67, %p68
      %p71 = scmp.ne.s32.totalorder %s54, %s70
      %p72 = scmp.eq.s32.totalorder %s25, 0
      %p73 = por %p71, %p72
      %s74 = ssub.s32 %s26, %s45
      %s75 = ssub.s32 %s28, %s37
      %s76 = sor.u32 %s74, %s75
      %p77 = scmp.eq.s32.totalorder %s76, 0
      %s79 = sadd.s32 %s78, 1
      %s80 = scalar_select %p77, %s78, %s79
      %p83 = pneg %p77
      %p84 = scmp.eq.s32.totalorder %s19, 1
      %p85 = por %p83, %p84
      %p86 = scmp.ne.s32.totalorder %s78, %s81
      %p87 = scmp.eq.s32.totalorder %s19, 0
      %p88 = por %p86, %p87
      %p89 = scmp.ne.s32.totalorder %s78, %s81
      %p90 = scmp.eq.s32.totalorder %s24, 1
      %p91 = por %p89, %p90
      %p92 = scmp.ne.s32.totalorder %s81, %s82
      %p93 = scmp.eq.s32.totalorder %s24, 0
      %p94 = por %p92, %p93
      %p95 = scmp.ne.s32.totalorder %s81, %s82
      %p96 = scmp.eq.s32.totalorder %s25, 1
      %p97 = por %p95, %p96
      %p99 = scmp.ne.s32.totalorder %s82, %s98
      %p100 = scmp.eq.s32.totalorder %s25, 0
      %p101 = por %p99, %p100
      %s103 = sadd.s32 %s102, 1
      %p106 = scmp.eq.s32.totalorder %s19, 1
      %p107 = scmp.ne.s32.totalorder %s102, %s104
      %p108 = scmp.eq.s32.totalorder %s19, 0
      %p109 = por %p107, %p108
      %p110 = scmp.ne.s32.totalorder %s102, %s104
      %p111 = scmp.eq.s32.totalorder %s24, 1
      %p112 = por %p110, %p111
      %p113 = scmp.ne.s32.totalorder %s104, %s105
      %p114 = scmp.eq.s32.totalorder %s24, 0
      %p115 = por %p113, %p114
      %p116 = scmp.ne.s32.totalorder %s104, %s105
      %p117 = scmp.eq.s32.totalorder %s25, 1
      %p118 = por %p116, %p117
      %p120 = scmp.ne.s32.totalorder %s105, %s119
      %p121 = scmp.eq.s32.totalorder %s25, 0
      %p122 = por %p120, %p121
      %s124 = sadd.s32 %s123, 1
      %p127 = scmp.eq.s32.totalorder %s19, 1
      %p128 = scmp.ne.s32.totalorder %s123, %s125
      %p129 = scmp.eq.s32.totalorder %s19, 0
      %p130 = por %p128, %p129
      %p131 = scmp.ne.s32.totalorder %s123, %s125
      %p132 = scmp.eq.s32.totalorder %s24, 1
      %p133 = por %p131, %p132
      %p134 = scmp.ne.s32.totalorder %s125, %s126
      %p135 = scmp.eq.s32.totalorder %s24, 0
      %p136 = por %p134, %p135
      %p137 = scmp.ne.s32.totalorder %s125, %s126
      %p138 = scmp.eq.s32.totalorder %s25, 1
      %p139 = por %p137, %p138
      %p141 = scmp.ne.s32.totalorder %s126, %s140
      %p142 = scmp.eq.s32.totalorder %s25, 0
      %p143 = por %p141, %p142
      %s144 = ssub.s32 %s26, %s45
      %s145 = ssub.s32 %s27, %s41
      %s146 = sor.u32 %s144, %s145
      %s147 = ssub.s32 %s28, %s37
      %s148 = sor.u32 %s146, %s147
      %p149 = scmp.eq.s32.totalorder %s148, 0
      %s151 = sadd.s32 %s150, 1
      %s152 = scalar_select %p149, %s150, %s151
      %p155 = pneg %p149
      %p156 = scmp.eq.s32.totalorder %s19, 1
      %p157 = por %p155, %p156
      %p158 = scmp.ne.s32.totalorder %s150, %s153
      %p159 = scmp.eq.s32.totalorder %s19, 0
      %p160 = por %p158, %p159
      %p161 = scmp.ne.s32.totalorder %s150, %s153
      %p162 = scmp.eq.s32.totalorder %s24, 1
      %p163 = por %p161, %p162
      %p164 = scmp.ne.s32.totalorder %s153, %s154
      %p165 = scmp.eq.s32.totalorder %s24, 0
      %p166 = por %p164, %p165
      %p167 = scmp.ne.s32.totalorder %s153, %s154
      %p168 = scmp.eq.s32.totalorder %s25, 1
      %p169 = por %p167, %p168
      %p171 = scmp.ne.s32.totalorder %s154, %s170
      %p172 = scmp.eq.s32.totalorder %s25, 0
      %p173 = por %p171, %p172
      %p174 = scmp.le.s32.totalorder 1, %s19
      %p175 = scmp.lt.s32.totalorder %s19, 3
      %p176 = pnand %p174, %p175
      %p177 = pneg %p176
      // Predicated region
      $region9: #{tpu_custom_call.1} parent=5 // pred_check
        _
      $region10: #{tpu_custom_call.1} parent=5 // pred_check_branch
        %179 = sbr.rel (%p176) target = $region12
      $region11: #{tpu_custom_call.1} parent=5 // pred_region
        %s180 = ssub.s32 %s19, 1
        // Predicated region
        $region13: #{tpu_custom_call.1} parent=11 // pred_check
          %p181 = pneg %p115
        $region14: #{tpu_custom_call.1} parent=11 // pred_check_branch
          %183 = sbr.rel (%p181) target = $region16
        $region15: #{tpu_custom_call.1} parent=11 // pred_region
          %s185 = ssub.s32 512, 512
          %186 = vsyncadd [#allocation6], %s185
          %s187 = sshll.u32 [#allocation7], 4
          %s188 = int_to_ptr.vmem [resolvable:$true] %s187
          %193 = dma.hbm_to_vmem [thread:$0]  %s2, 512, %s188, [#allocation6], 128, 128, 8
        $region16: #{tpu_custom_call.1} parent=11 // pred_fallthru
          _
        // Predicated region
        $region17: #{tpu_custom_call.1} parent=11 // pred_check
          %p194 = pneg %p136
        $region18: #{tpu_custom_call.1} parent=11 // pred_check_branch
          %196 = sbr.rel (%p194) target = $region20
        $region19: #{tpu_custom_call.1} parent=11 // pred_region
          _
        $region20: #{tpu_custom_call.1} parent=11 // pred_fallthru
          _
      $region12: #{tpu_custom_call.1} parent=5 // pred_fallthru
        _
      %p197 = scmp.lt.s32.totalorder %s19, 2
      // Predicated region
      $region21: #{tpu_custom_call.1} parent=5 // pred_check
        %p198 = pneg %p197
      $region22: #{tpu_custom_call.1} parent=5 // pred_check_branch
        %200 = sbr.rel (%p198) target = $region24
      $region23: #{tpu_custom_call.1} parent=5 // pred_region
        // Predicated region
        $region25: #{tpu_custom_call.1} parent=23 // pred_check
          %p201 = pneg %p60
        $region26: #{tpu_custom_call.1} parent=23 // pred_check_branch
          %203 = sbr.rel (%p201) target = $region28
        $region27: #{tpu_custom_call.1} parent=23 // pred_region
          %s204 = sand.u32 %s50, 1
          %s205 = scalar_lea.sflag [#allocation3], %s204
          %s206 = sand.u32 %s50, 1
          %s207 = smul.addr %s206, 8
          %s208 = scalar_lea.vmem [#allocation2], %s207
          %s210 = ssub.s32 128, 128
          %211 = vsyncadd %s205, %s210
          %s212 = sadd.s32 %s27, %s26
          %s213 = smul.addr %s212, 128
          %s214 = scalar_lea.hbm %s0, %s213
          %s216 = sshll.u32 %s208, 4
          %s217 = int_to_ptr.vmem [resolvable:$true] %s216
          %219 = dma.hbm_to_vmem [thread:$0]  %s214, 128, %s217, %s205
        $region28: #{tpu_custom_call.1} parent=23 // pred_fallthru
          _
        // Predicated region
        $region29: #{tpu_custom_call.1} parent=23 // pred_check
          %p220 = pneg %p88
        $region30: #{tpu_custom_call.1} parent=23 // pred_check_branch
          %222 = sbr.rel (%p220) target = $region32
        $region31: #{tpu_custom_call.1} parent=23 // pred_region
          %s223 = sand.u32 %s19, 1
          %s224 = scalar_lea.sflag [#allocation6], %s223
          %s225 = sand.u32 %s78, 1
          %s226 = smul.addr %s225, 8
          %s227 = scalar_lea.vmem [#allocation5], %s226
          %s229 = ssub.s32 128, 128
          %230 = vsyncadd %s224, %s229
          %s231 = sadd.s32 %s28, %s26
          %s232 = smul.addr %s231, 128
          %s233 = scalar_lea.hbm %s1, %s232
          %s235 = sshll.u32 %s227, 4
          %s236 = int_to_ptr.vmem [resolvable:$true] %s235
          %238 = dma.hbm_to_vmem [thread:$0]  %s233, 128, %s236, %s224
        $region32: #{tpu_custom_call.1} parent=23 // pred_fallthru
          _
      $region24: #{tpu_custom_call.1} parent=5 // pred_fallthru
        _
      %p239 = scmp.le.s32.totalorder 1, %s19
      %p240 = scmp.lt.s32.totalorder %s19, 3
      %p241 = pnand %p239, %p240
      %p242 = pneg %p241
      // Predicated region
      $region33: #{tpu_custom_call.1} parent=5 // pred_check
        _
      $region34: #{tpu_custom_call.1} parent=5 // pred_check_branch
        %244 = sbr.rel (%p241) target = $region36
      $region35: #{tpu_custom_call.1} parent=5 // pred_region
        %s245 = ssub.s32 %s19, 1
        %s246 = sand.u32 %s53, 1
        %s247 = scalar_lea.sflag [#allocation3], %s246
        %s248 = sand.u32 %s53, 1
        %s249 = smul.addr %s248, 8
        %s250 = scalar_lea.vmem [#allocation2], %s249
        // Predicated region
        $region37: #{tpu_custom_call.1} parent=35 // pred_check
          %p251 = pneg %p66
        $region38: #{tpu_custom_call.1} parent=35 // pred_check_branch
          %253 = sbr.rel (%p251) target = $region40
        $region39: #{tpu_custom_call.1} parent=35 // pred_region
          %254 = dma.done %s247, 128
        $region40: #{tpu_custom_call.1} parent=35 // pred_fallthru
          _
        %s255 = sand.u32 %s24, 1
        %s256 = scalar_lea.sflag [#allocation6], %s255
        %s257 = sand.u32 %s81, 1
        %s258 = smul.addr %s257, 8
        %s259 = scalar_lea.vmem [#allocation5], %s258
        // Predicated region
        $region41: #{tpu_custom_call.1} parent=35 // pred_check
          %p260 = pneg %p94
        $region42: #{tpu_custom_call.1} parent=35 // pred_check_branch
          %262 = sbr.rel (%p260) target = $region44
        $region43: #{tpu_custom_call.1} parent=35 // pred_region
          %263 = dma.done %s256, 128
        $region44: #{tpu_custom_call.1} parent=35 // pred_fallthru
          _
        // Predicated region
        $region45: #{tpu_custom_call.1} parent=35 // pred_check
          %p264 = pneg %p115
        $region46: #{tpu_custom_call.1} parent=35 // pred_check_branch
          %266 = sbr.rel (%p264) target = $region48
        $region47: #{tpu_custom_call.1} parent=35 // pred_region
          %267 = dma.done [#allocation6], 512
        $region48: #{tpu_custom_call.1} parent=35 // pred_fallthru
          _
        %s268 = sand.u32 %s53, 1
        %s269 = scalar_lea.sflag [#allocation3], %s268
        %s270 = sand.u32 %s53, 1
        %s271 = smul.addr %s270, 8
        %s272 = scalar_lea.vmem [#allocation2], %s271
        %p273 = pneg %p66
        %p274 = pneg %p63
        %s275 = sand.u32 %s24, 1
        %s276 = scalar_lea.sflag [#allocation6], %s275
        %s277 = sand.u32 %s81, 1
        %s278 = smul.addr %s277, 8
        %s279 = scalar_lea.vmem [#allocation5], %s278
        %p280 = pneg %p94
        %p281 = pneg %p91
        %p282 = pneg %p115
        %p283 = pneg %p112
        %p284 = pneg %p136
        %p285 = pneg %p133
        %p286 = pneg %p166
        %p287 = pneg %p163
        %s288 = sand.u32 %s153, 1
        %s289 = scalar_lea.sflag [#allocation4], %s288
        %s290 = sand.u32 %s153, 1
        %s291 = smul.addr %s290, 64
        %s292 = scalar_lea.vmem [#allocation8], %s291
        %s293 = smul.u32 8, %s30
        %v294 = vld [vmem:[%s250] sm:$0xff]
        %v295 = vld [vmem:[%s259] sm:$0xff]
        %v296 = vld [vmem:[#allocation7] sm:$0xff]
        %v297 = vld [vmem:[#allocation7 + $0x8] sm:$0xff]
        %v298 = vld [vmem:[#allocation7 + $0x10] sm:$0xff]
        %v299 = vld [vmem:[#allocation7 + $0x18] sm:$0xff]
        %v300 = vld [vmem:[%s3] sm:$0x1]
        %v302 = vcombine.high %v294, %v294
        %v304 = vunpack.c.l.s4 1966171168
        %v305 = vunpack.c.0.s8 %v304
        %v306 = vlaneseq
        %v307 = vshrl.u32 %v306, 7
        %v308 = vsub.s32 %v305, %v307
        %v309 = vrot.slane %v294, %v308
        %v311 = vunpack.c.l.s4 1966171168
        %v312 = vunpack.c.0.s8 %v311
        %v313 = vlaneseq
        %v314 = vshrl.u32 %v313, 7
        %v315 = vsub.s32 %v312, %v314
        %v316 = vrot.slane %v302, %v315
        %v317 = vcombine.high %v309, %v309
        %v318 = vcombine.high %v316, %v316
        %v320 = vunpack.c.l.s4 1966171168
        %v321 = vunpack.c.0.s8 %v320
        %v322 = vlaneseq
        %v323 = vshrl.u32 %v322, 7
        %v324 = vsub.s32 %v321, %v323
        %v325 = vrot.slane %v309, %v324
        %v327 = vunpack.c.l.s4 1966171168
        %v328 = vunpack.c.0.s8 %v327
        %v329 = vlaneseq
        %v330 = vshrl.u32 %v329, 7
        %v331 = vsub.s32 %v328, %v330
        %v332 = vrot.slane %v316, %v331
        %v334 = vunpack.c.l.s4 1966171168
        %v335 = vunpack.c.0.s8 %v334
        %v336 = vlaneseq
        %v337 = vshrl.u32 %v336, 7
        %v338 = vsub.s32 %v335, %v337
        %v339 = vrot.slane %v317, %v338
        %v341 = vunpack.c.l.s4 1966171168
        %v342 = vunpack.c.0.s8 %v341
        %v343 = vlaneseq
        %v344 = vshrl.u32 %v343, 7
        %v345 = vsub.s32 %v342, %v344
        %v346 = vrot.slane %v318, %v345
        %v347 = vcombine.high %v325, %v325
        %v348 = vcombine.high %v332, %v332
        %v349 = vcombine.high %v339, %v339
        %v350 = vcombine.high %v346, %v346
        %v351 = vlaneseq
        %v352 = vshrl.u32 %v351, 7
        %v353 = vsub.s32 0, %v352
        %v354 = vrot.slane %v325, %v353
        %v355 = vlaneseq
        %v356 = vshrl.u32 %v355, 7
        %v357 = vsub.s32 0, %v356
        %v358 = vrot.slane %v339, %v357
        %v359 = vlaneseq
        %v360 = vshrl.u32 %v359, 7
        %v361 = vsub.s32 0, %v360
        %v362 = vrot.slane %v347, %v361
        %v363 = vlaneseq
        %v364 = vshrl.u32 %v363, 7
        %v365 = vsub.s32 0, %v364
        %v366 = vrot.slane %v349, %v365
        %v367 = vlaneseq
        %v368 = vshrl.u32 %v367, 7
        %v369 = vsub.s32 0, %v368
        %v370 = vrot.slane %v332, %v369
        %v371 = vlaneseq
        %v372 = vshrl.u32 %v371, 7
        %v373 = vsub.s32 0, %v372
        %v374 = vrot.slane %v346, %v373
        %v375 = vlaneseq
        %v376 = vshrl.u32 %v375, 7
        %v377 = vsub.s32 0, %v376
        %v378 = vrot.slane %v348, %v377
        %v379 = vlaneseq
        %v380 = vshrl.u32 %v379, 7
        %v381 = vsub.s32 0, %v380
        %v382 = vrot.slane %v350, %v381
        %v391 = vmul.f32 %v354, %v295
        %v392 = vmul.f32 %v358, %v295
        %v393 = vmul.f32 %v362, %v295
        %v394 = vmul.f32 %v366, %v295
        %v395 = vmul.f32 %v370, %v295
        %v396 = vmul.f32 %v374, %v295
        %v397 = vmul.f32 %v378, %v295
        %v398 = vmul.f32 %v382, %v295
        %v400 = vlaneseq
        %v401 = vshrl.u32 %v400, 7
        %v402 = vsub.s32 0, %v401
        %v403 = vrot.slane %v300, %v402
        %vm405 = vcmask 261120
        %v407 = vsel %vm405, %v391, 0
        %v410 = vsel %vm405, %v392, 0
        %v413 = vsel %vm405, %v393, 0
        %v416 = vsel %vm405, %v394, 0
        %v419 = vsel %vm405, %v395, 0
        %v422 = vsel %vm405, %v396, 0
        %v425 = vsel %vm405, %v397, 0
        %v428 = vsel %vm405, %v398, 0
        %430 = vmatprep.subr.mxu0 0.0
        %431 = vmatpush1.msra.mxu0 0.0
        %432 = vmatprep.subr.mxu0 0.0
        %433 = vmatpush1.msra.mxu0 0.0
        %434 = vmatprep.subr.mxu0 0.0
        %435 = vmatpush1.msra.mxu0 0.0
        %436 = vmatprep.subr.mxu0 0.0
        %437 = vmatpush1.msra.mxu0 0.0
        %438 = vmatprep.subr.mxu0 0.0
        %439 = vmatpush1.msra.mxu0 0.0
        %440 = vmatprep.subr.mxu0 0.0
        %441 = vmatpush1.msra.mxu0 0.0
        %442 = vmatprep.subr.mxu0 0.0
        %443 = vmatpush1.msra.mxu0 0.0
        %444 = vmatprep.subr.mxu0 0.0
        %445 = vmatpush1.msra.mxu0 0.0
        %446 = vmatprep.subr.mxu0 0.0
        %447 = vmatpush1.msra.mxu0 0.0
        %448 = vmatprep.subr.mxu0 0.0
        %449 = vmatpush1.msra.mxu0 0.0
        %450 = vmatprep.subr.mxu0 0.0
        %451 = vmatpush1.msra.mxu0 0.0
        %452 = vmatprep.subr.mxu0 0.0
        %453 = vmatpush1.msra.mxu0 0.0
        %454 = vmatprep.subr.mxu0 0.0
        %455 = vmatpush1.msra.mxu0 %v299
        %456 = vmatprep.subr.mxu0 0.0
        %457 = vmatpush1.msra.mxu0 %v298
        %458 = vmatprep.subr.mxu0 0.0
        %459 = vmatpush1.msra.mxu0 %v297
        %460 = vmatprep.subr.mxu0 0.0
        %461 = vmatpush1.msra.mxu0 %v296
        %462 = vmatprep.subr.mxu0 0.0
        %463 = vmatpush2.msra.mxu0 0.0
        %464 = vmatprep.subr.mxu0 0.0
        %465 = vmatpush2.msra.mxu0 0.0
        %466 = vmatprep.subr.mxu0 0.0
        %467 = vmatpush2.msra.mxu0 0.0
        %468 = vmatprep.subr.mxu0 0.0
        %469 = vmatpush2.msra.mxu0 0.0
        %470 = vmatprep.subr.mxu0 0.0
        %471 = vmatpush2.msra.mxu0 0.0
        %472 = vmatprep.subr.mxu0 0.0
        %473 = vmatpush2.msra.mxu0 0.0
        %474 = vmatprep.subr.mxu0 0.0
        %475 = vmatpush2.msra.mxu0 0.0
        %476 = vmatprep.subr.mxu0 0.0
        %477 = vmatpush2.msra.mxu0 0.0
        %478 = vmatprep.subr.mxu0 0.0
        %479 = vmatpush2.msra.mxu0 0.0
        %480 = vmatprep.subr.mxu0 0.0
        %481 = vmatpush2.msra.mxu0 0.0
        %482 = vmatprep.subr.mxu0 0.0
        %483 = vmatpush2.msra.mxu0 0.0
        %484 = vmatprep.subr.mxu0 0.0
        %485 = vmatpush2.msra.mxu0 0.0
        %486 = vmatprep.subr.mxu0 0.0
        %487 = vmatpush2.msra.mxu0 0.0
        %488 = vmatprep.subr.mxu0 0.0
        %489 = vmatpush2.msra.mxu0 0.0
        %490 = vmatprep.subr.mxu0 0.0
        %491 = vmatpush2.msra.mxu0 0.0
        %492 = vmatprep.subr.mxu0 0.0
        %493 = vmatpush2.msra.mxu0 0.0
        %494 = vmatprep.mubr.f32.mxu0 0.0
        %495 = vmatmul.mubr.f32.gmra.mxu0 %v407
        %v496 = vpop.f32.mrf.mxu0
        %v497 = vadd.f32 %v403, %v496
        %v498 = vpop.f32.mrf.mxu0
        %499 = vmatprep.mubr.f32.mxu0 0.0
        %500 = vmatmul.mubr.f32.gmra.mxu0 %v410
        %v501 = vpop.f32.mrf.mxu0
        %v502 = vadd.f32 %v403, %v501
        %v503 = vpop.f32.mrf.mxu0
        %504 = vmatprep.mubr.f32.mxu0 0.0
        %505 = vmatmul.mubr.f32.gmra.mxu0 %v413
        %v506 = vpop.f32.mrf.mxu0
        %v507 = vadd.f32 %v403, %v506
        %v508 = vpop.f32.mrf.mxu0
        %509 = vmatprep.mubr.f32.mxu0 0.0
        %510 = vmatmul.mubr.f32.gmra.mxu0 %v416
        %v511 = vpop.f32.mrf.mxu0
        %v512 = vadd.f32 %v403, %v511
        %v513 = vpop.f32.mrf.mxu0
        %514 = vmatprep.mubr.f32.mxu0 0.0
        %515 = vmatmul.mubr.f32.gmra.mxu0 %v419
        %v516 = vpop.f32.mrf.mxu0
        %v517 = vadd.f32 %v403, %v516
        %v518 = vpop.f32.mrf.mxu0
        %519 = vmatprep.mubr.f32.mxu0 0.0
        %520 = vmatmul.mubr.f32.gmra.mxu0 %v422
        %v521 = vpop.f32.mrf.mxu0
        %v522 = vadd.f32 %v403, %v521
        %v523 = vpop.f32.mrf.mxu0
        %524 = vmatprep.mubr.f32.mxu0 0.0
        %525 = vmatmul.mubr.f32.gmra.mxu0 %v425
        %v526 = vpop.f32.mrf.mxu0
        %v527 = vadd.f32 %v403, %v526
        %v528 = vpop.f32.mrf.mxu0
        %529 = vmatprep.mubr.f32.mxu0 0.0
        %530 = vmatmul.mubr.f32.gmra.mxu0 %v428
        %v531 = vpop.f32.mrf.mxu0
        %v532 = vadd.f32 %v403, %v531
        %v533 = vpop.f32.mrf.mxu0
        %534 = vdwg.mxu0
        %535 = vmax.xlane.f32.xlu0 %v497
        %v536 = vpop.xlane.xlu0 %535
        %537 = vmax.xlane.f32.xlu0 %v502
        %v538 = vpop.xlane.xlu0 %537
        %539 = vmax.xlane.f32.xlu0 %v507
        %v540 = vpop.xlane.xlu0 %539
        %541 = vmax.xlane.f32.xlu0 %v512
        %v542 = vpop.xlane.xlu0 %541
        %543 = vmax.xlane.f32.xlu0 %v517
        %v544 = vpop.xlane.xlu0 %543
        %545 = vmax.xlane.f32.xlu0 %v522
        %v546 = vpop.xlane.xlu0 %545
        %547 = vmax.xlane.f32.xlu0 %v527
        %v548 = vpop.xlane.xlu0 %547
        %549 = vmax.xlane.f32.xlu0 %v532
        %v550 = vpop.xlane.xlu0 %549
        %v551 = vsub.f32 %v497, %v536
        %v552 = vsub.f32 %v502, %v538
        %v553 = vsub.f32 %v507, %v540
        %v554 = vsub.f32 %v512, %v542
        %v555 = vsub.f32 %v517, %v544
        %v556 = vsub.f32 %v522, %v546
        %v557 = vsub.f32 %v527, %v548
        %v558 = vsub.f32 %v532, %v550
        %v559 = vmul.f32 %v551, 1.442695
        %v560 = vpow.pop %v559
        %v561 = vmul.f32 %v552, 1.442695
        %v562 = vpow.pop %v561
        %v563 = vmul.f32 %v553, 1.442695
        %v564 = vpow.pop %v563
        %v565 = vmul.f32 %v554, 1.442695
        %v566 = vpow.pop %v565
        %v567 = vmul.f32 %v555, 1.442695
        %v568 = vpow.pop %v567
        %v569 = vmul.f32 %v556, 1.442695
        %v570 = vpow.pop %v569
        %v571 = vmul.f32 %v557, 1.442695
        %v572 = vpow.pop %v571
        %v573 = vmul.f32 %v558, 1.442695
        %v574 = vpow.pop %v573
        %575 = vadd.xlane.f32.xlu0 %v560
        %v576 = vpop.xlane.xlu0 %575
        %577 = vadd.xlane.f32.xlu0 %v562
        %v578 = vpop.xlane.xlu0 %577
        %579 = vadd.xlane.f32.xlu0 %v564
        %v580 = vpop.xlane.xlu0 %579
        %581 = vadd.xlane.f32.xlu0 %v566
        %v582 = vpop.xlane.xlu0 %581
        %583 = vadd.xlane.f32.xlu0 %v568
        %v584 = vpop.xlane.xlu0 %583
        %585 = vadd.xlane.f32.xlu0 %v570
        %v586 = vpop.xlane.xlu0 %585
        %587 = vadd.xlane.f32.xlu0 %v572
        %v588 = vpop.xlane.xlu0 %587
        %589 = vadd.xlane.f32.xlu0 %v574
        %v590 = vpop.xlane.xlu0 %589
        %v591 = vrcp.pop %v576
        %v592 = vmul.f32 %v560, %v591
        %v593 = vrcp.pop %v578
        %v594 = vmul.f32 %v562, %v593
        %v595 = vrcp.pop %v580
        %v596 = vmul.f32 %v564, %v595
        %v597 = vrcp.pop %v582
        %v598 = vmul.f32 %v566, %v597
        %v599 = vrcp.pop %v584
        %v600 = vmul.f32 %v568, %v599
        %v601 = vrcp.pop %v586
        %v602 = vmul.f32 %v570, %v601
        %v603 = vrcp.pop %v588
        %v604 = vmul.f32 %v572, %v603
        %v605 = vrcp.pop %v590
        %v606 = vmul.f32 %v574, %v605
        %vm607 = vcmask 130048
        %608 = vst.msk [vmem:[%s292] sm:$0xff] %vm607, %v592
        %609 = vst.msk [vmem:[%s292 + $0x8] sm:$0xff] %vm607, %v594
        %610 = vst.msk [vmem:[%s292 + $0x10] sm:$0xff] %vm607, %v596
        %611 = vst.msk [vmem:[%s292 + $0x18] sm:$0xff] %vm607, %v598
        %612 = vst.msk [vmem:[%s292 + $0x20] sm:$0xff] %vm607, %v600
        %613 = vst.msk [vmem:[%s292 + $0x28] sm:$0xff] %vm607, %v602
        %614 = vst.msk [vmem:[%s292 + $0x30] sm:$0xff] %vm607, %v604
        %615 = vst.msk [vmem:[%s292 + $0x38] sm:$0xff] %vm607, %v606
        %s616 = sand.u32 %s153, 1
        %s617 = scalar_lea.sflag [#allocation4], %s616
        %s618 = sand.u32 %s153, 1
        %s619 = smul.addr %s618, 64
        %s620 = scalar_lea.vmem [#allocation8], %s619
        // Predicated region
        $region49: #{tpu_custom_call.1} parent=35 // pred_check
          %p621 = pneg %p163
        $region50: #{tpu_custom_call.1} parent=35 // pred_check_branch
          %623 = sbr.rel (%p621) target = $region52
        $region51: #{tpu_custom_call.1} parent=35 // pred_region
          %s624 = smul.u32 8, %s30
          %s626 = ssub.s32 1024, 1024
          %627 = vsyncadd %s617, %s626
          %s628 = sadd.s32 %s31, %s624
          %s629 = smul.addr %s29, 8
          %s630 = sadd.s32 %s628, %s629
          %s631 = smul.addr %s630, 128
          %s632 = scalar_lea.hbm %s4, %s631
          %s633 = sshll.u32 %s620, 4
          %s634 = int_to_ptr.vmem [resolvable:$true] %s633
          %639 = dma.vmem_to_hbm [thread:$0]  %s634, 1024, %s632, %s617, 128, 128, 8
        $region52: #{tpu_custom_call.1} parent=35 // pred_fallthru
          _
      $region36: #{tpu_custom_call.1} parent=5 // pred_fallthru
        _
      %p640 = scmp.le.s32.totalorder 2, %s19
      // Predicated region
      $region53: #{tpu_custom_call.1} parent=5 // pred_check
        %p641 = pneg %p640
      $region54: #{tpu_custom_call.1} parent=5 // pred_check_branch
        %643 = sbr.rel (%p641) target = $region56
      $region55: #{tpu_custom_call.1} parent=5 // pred_region
        %s644 = ssub.s32 %s19, 2
        // Predicated region
        $region57: #{tpu_custom_call.1} parent=55 // pred_check
          %p645 = pneg %p169
        $region58: #{tpu_custom_call.1} parent=55 // pred_check_branch
          %647 = sbr.rel (%p645) target = $region60
        $region59: #{tpu_custom_call.1} parent=55 // pred_region
          %s648 = sand.u32 %s154, 1
          %s649 = scalar_lea.sflag [#allocation4], %s648
          %s650 = sand.u32 %s154, 1
          %s651 = smul.addr %s650, 64
          %s652 = scalar_lea.vmem [#allocation8], %s651
          %653 = dma.done %s649, 1024
        $region60: #{tpu_custom_call.1} parent=55 // pred_fallthru
          _
      $region56: #{tpu_custom_call.1} parent=5 // pred_fallthru
        _
    $region6: #{tpu_custom_call.1} parent=1 // loop_footer
      %s23 = sadd.s32 1, %s19
    $region7: #{tpu_custom_call.1} parent=1 // loop_footer_branch
      %18 = sbr.rel target = $region3
    $region8: #{tpu_custom_call.1} parent=1 // loop_exit
      _
    %654 = vsyncpa [#allocation3], 1
    %s655 = scalar_lea.sflag [#allocation3], 1
    %656 = vsyncpa %s655, 1
    %657 = vsyncpa [#allocation6], 1
    %s658 = scalar_lea.sflag [#allocation6], 1
    %659 = vsyncpa %s658, 1
    %660 = vsyncpa [#allocation4], 1
    %s661 = scalar_lea.sflag [#allocation4], 1
    %662 = vsyncpa %s661, 1

// kernel: tpu_custom_call.1
$region0: #{tpu_custom_call.1}
  #allocation0 [shape = 'u32[]', space=smem, size = 0x4, offset = 0x4, fixed_abs, tag = 'smem constant byte address 0x4 - core index']
  #allocation1 [shape = 'u32[144,128]{1,0:T(1,128)}', space=vmem, size = 0x12000, scoped, tag = 'internal scratch']
  %s0 = inlined_call_operand.hbm [shape: f32[2,8,32], index: 0, kind: input, shape index: {}]
  %s1 = inlined_call_operand.hbm [shape: f32[2,8,32], index: 1, kind: input, shape index: {}]
  %s2 = inlined_call_operand.hbm [shape: f32[32,128], index: 2, kind: input, shape index: {}]
  %s3 = inlined_call_operand.vmem [shape: f32[1,128], index: 3, kind: input, shape index: {}]
  %s4 = inlined_call_operand.hbm [shape: f32[2,8,8,16], index: 4, kind: output, shape index: {}]
  %s5 = sld [smem:[#allocation0]]
  $region61: #{tpu_custom_call.1} parent=0
    _
  %s7 = ssub.s32 1, %s5
  %s8 = scalar_select 0, %s7, %s5
  $region1: #{tpu_custom_call.1} parent=0
    #allocation2 [shape = 'u8[8192]{0}', space=vmem, size = 0x2000, scoped, tag = 'input window, operand 0']
    #allocation3 [shape = 's32[2]{0}', space=sflag, size = 0x8, scoped, tag = 'scoped memory for tpu_custom_call.1']
    #allocation4 [shape = 's32[2]{0}', space=sflag, size = 0x8, scoped, tag = 'scoped memory for tpu_custom_call.1']
    #allocation5 [shape = 'u8[8192]{0}', space=vmem, size = 0x2000, scoped, tag = 'input window, operand 1']
    #allocation6 [shape = 's32[2]{0}', space=sflag, size = 0x8, scoped, tag = 'scoped memory for tpu_custom_call.1']
    #allocation7 [shape = 'u8[16384]{0}', space=vmem, size = 0x4000, scoped, tag = 'input window, operand 2, single buffered']
    #allocation8 [shape = 'u8[65536]{0}', space=vmem, size = 0x10000, scoped, tag = 'output window, operand 0']
    %9 = vsyncpa [#allocation3], 0
    %s10 = scalar_lea.sflag [#allocation3], 1
    %11 = vsyncpa %s10, 0
    %12 = vsyncpa [#allocation6], 0
    %s13 = scalar_lea.sflag [#allocation6], 1
    %14 = vsyncpa %s13, 0
    %15 = vsyncpa [#allocation4], 0
    %s16 = scalar_lea.sflag [#allocation4], 1
    %17 = vsyncpa %s16, 0
    loop: start=0, step=1, limit=4
    $region2: #{tpu_custom_call.1} parent=1 // loop_pre_header
      _
    $region3: #{tpu_custom_call.1} parent=1 // loop_header
      %s19 = sphi 0, %s23
      %p20 = scmp.ge.s32.totalorder %s19, 4
      %s26 = sphi 0, %s45
      %s27 = sphi 0, %s41
      %s28 = sphi 0, %s37
      %s29 = sphi 0, %s26
      %s30 = sphi 0, %s27
      %s31 = sphi 0, %s28
      %s32 = sphi 0, %s29
      %s33 = sphi 0, %s30
      %s34 = sphi 0, %s31
      %s50 = sphi 0, %s52
      %s53 = sphi 0, %s50
      %s54 = sphi 0, %s53
      %s70 = sphi 0, %s54
      %s78 = sphi 0, %s80
      %s81 = sphi 0, %s78
      %s82 = sphi 0, %s81
      %s98 = sphi 0, %s82
      %s102 = sphi 0, %s102
      %s104 = sphi 0, %s102
      %s105 = sphi 0, %s104
      %s119 = sphi 0, %s105
      %s123 = sphi 0, %s123
      %s125 = sphi 0, %s123
      %s126 = sphi 0, %s125
      %s140 = sphi 0, %s126
      %s150 = sphi 0, %s152
      %s153 = sphi 0, %s150
      %s154 = sphi 0, %s153
      %s170 = sphi 0, %s154
    $region4: #{tpu_custom_call.1} parent=1 // loop_header_branch
      %22 = sbr.rel (%p20) target = $region8
    $region5: #{tpu_custom_call.1} parent=1 // loop_body
      %s24 = ssub.s32 %s19, 1
      %s25 = ssub.s32 %s19, 2
      %s35 = sadd.s32 1, %s28
      %p36 = scmp.ge.s32.totalorder %s35, 1
      %s37 = scalar_select %p36, 0, %s35
      %s38 = sadd.s32 1, %s27
      %s39 = scalar_select %p36, %s38, %s27
      %p40 = scmp.ge.s32.totalorder %s39, 1
      %s41 = scalar_select %p40, 0, %s39
      %s42 = sadd.s32 1, %s26
      %s43 = scalar_select %p40, %s42, %s26
      %p44 = scmp.ge.s32.totalorder %s43, 2
      %s45 = scalar_select %p44, 0, %s43
      %s46 = ssub.s32 %s26, %s45
      %s47 = ssub.s32 %s27, %s41
      %s48 = sor.u32 %s46, %s47
      %p49 = scmp.eq.s32.totalorder %s48, 0
      %s51 = sadd.s32 %s50, 1
      %s52 = scalar_select %p49, %s50, %s51
      %p55 = pneg %p49
      %p56 = scmp.eq.s32.totalorder %s19, 1
      %p57 = por %p55, %p56
      %p58 = scmp.ne.s32.totalorder %s50, %s53
      %p59 = scmp.eq.s32.totalorder %s19, 0
      %p60 = por %p58, %p59
      %p61 = scmp.ne.s32.totalorder %s50, %s53
      %p62 = scmp.eq.s32.totalorder %s24, 1
      %p63 = por %p61, %p62
      %p64 = scmp.ne.s32.totalorder %s53, %s54
      %p65 = scmp.eq.s32.totalorder %s24, 0
      %p66 = por %p64, %p65
      %p67 = scmp.ne.s32.totalorder %s53, %s54
      %p68 = scmp.eq.s32.totalorder %s25, 1
      %p69 = por %p67, %p68
      %p71 = scmp.ne.s32.totalorder %s54, %s70
      %p72 = scmp.eq.s32.totalorder %s25, 0
      %p73 = por %p71, %p72
      %s74 = ssub.s32 %s26, %s45
      %s75 = ssub.s32 %s28, %s37
      %s76 = sor.u32 %s74, %s75
      %p77 = scmp.eq.s32.totalorder %s76, 0
      %s79 = sadd.s32 %s78, 1
      %s80 = scalar_select %p77, %s78, %s79
      %p83 = pneg %p77
      %p84 = scmp.eq.s32.totalorder %s19, 1
      %p85 = por %p83, %p84
      %p86 = scmp.ne.s32.totalorder %s78, %s81
      %p87 = scmp.eq.s32.totalorder %s19, 0
      %p88 = por %p86, %p87
      %p89 = scmp.ne.s32.totalorder %s78, %s81
      %p90 = scmp.eq.s32.totalorder %s24, 1
      %p91 = por %p89, %p90
      %p92 = scmp.ne.s32.totalorder %s81, %s82
      %p93 = scmp.eq.s32.totalorder %s24, 0
      %p94 = por %p92, %p93
      %p95 = scmp.ne.s32.totalorder %s81, %s82
      %p96 = scmp.eq.s32.totalorder %s25, 1
      %p97 = por %p95, %p96
      %p99 = scmp.ne.s32.totalorder %s82, %s98
      %p100 = scmp.eq.s32.totalorder %s25, 0
      %p101 = por %p99, %p100
      %s103 = sadd.s32 %s102, 1
      %p106 = scmp.eq.s32.totalorder %s19, 1
      %p107 = scmp.ne.s32.totalorder %s102, %s104
      %p108 = scmp.eq.s32.totalorder %s19, 0
      %p109 = por %p107, %p108
      %p110 = scmp.ne.s32.totalorder %s102, %s104
      %p111 = scmp.eq.s32.totalorder %s24, 1
      %p112 = por %p110, %p111
      %p113 = scmp.ne.s32.totalorder %s104, %s105
      %p114 = scmp.eq.s32.totalorder %s24, 0
      %p115 = por %p113, %p114
      %p116 = scmp.ne.s32.totalorder %s104, %s105
      %p117 = scmp.eq.s32.totalorder %s25, 1
      %p118 = por %p116, %p117
      %p120 = scmp.ne.s32.totalorder %s105, %s119
      %p121 = scmp.eq.s32.totalorder %s25, 0
      %p122 = por %p120, %p121
      %s124 = sadd.s32 %s123, 1
      %p127 = scmp.eq.s32.totalorder %s19, 1
      %p128 = scmp.ne.s32.totalorder %s123, %s125
      %p129 = scmp.eq.s32.totalorder %s19, 0
      %p130 = por %p128, %p129
      %p131 = scmp.ne.s32.totalorder %s123, %s125
      %p132 = scmp.eq.s32.totalorder %s24, 1
      %p133 = por %p131, %p132
      %p134 = scmp.ne.s32.totalorder %s125, %s126
      %p135 = scmp.eq.s32.totalorder %s24, 0
      %p136 = por %p134, %p135
      %p137 = scmp.ne.s32.totalorder %s125, %s126
      %p138 = scmp.eq.s32.totalorder %s25, 1
      %p139 = por %p137, %p138
      %p141 = scmp.ne.s32.totalorder %s126, %s140
      %p142 = scmp.eq.s32.totalorder %s25, 0
      %p143 = por %p141, %p142
      %s144 = ssub.s32 %s26, %s45
      %s145 = ssub.s32 %s27, %s41
      %s146 = sor.u32 %s144, %s145
      %s147 = ssub.s32 %s28, %s37
      %s148 = sor.u32 %s146, %s147
      %p149 = scmp.eq.s32.totalorder %s148, 0
      %s151 = sadd.s32 %s150, 1
      %s152 = scalar_select %p149, %s150, %s151
      %p155 = pneg %p149
      %p156 = scmp.eq.s32.totalorder %s19, 1
      %p157 = por %p155, %p156
      %p158 = scmp.ne.s32.totalorder %s150, %s153
      %p159 = scmp.eq.s32.totalorder %s19, 0
      %p160 = por %p158, %p159
      %p161 = scmp.ne.s32.totalorder %s150, %s153
      %p162 = scmp.eq.s32.totalorder %s24, 1
      %p163 = por %p161, %p162
      %p164 = scmp.ne.s32.totalorder %s153, %s154
      %p165 = scmp.eq.s32.totalorder %s24, 0
      %p166 = por %p164, %p165
      %p167 = scmp.ne.s32.totalorder %s153, %s154
      %p168 = scmp.eq.s32.totalorder %s25, 1
      %p169 = por %p167, %p168
      %p171 = scmp.ne.s32.totalorder %s154, %s170
      %p172 = scmp.eq.s32.totalorder %s25, 0
      %p173 = por %p171, %p172
      %p174 = scmp.le.s32.totalorder 1, %s19
      %p175 = scmp.lt.s32.totalorder %s19, 3
      %p176 = pnand %p174, %p175
      %p177 = pneg %p176
      // Predicated region
      $region9: #{tpu_custom_call.1} parent=5 // pred_check
        _
      $region10: #{tpu_custom_call.1} parent=5 // pred_check_branch
        %179 = sbr.rel (%p176) target = $region12
      $region11: #{tpu_custom_call.1} parent=5 // pred_region
        %s180 = ssub.s32 %s19, 1
        // Predicated region
        $region13: #{tpu_custom_call.1} parent=11 // pred_check
          %p181 = pneg %p115
        $region14: #{tpu_custom_call.1} parent=11 // pred_check_branch
          %183 = sbr.rel (%p181) target = $region16
        $region15: #{tpu_custom_call.1} parent=11 // pred_region
          %s185 = ssub.s32 512, 512
          %186 = vsyncadd [#allocation6], %s185
          %s187 = sshll.u32 [#allocation7], 4
          %s188 = int_to_ptr.vmem [resolvable:$true] %s187
          %193 = dma.hbm_to_vmem [thread:$0]  %s2, 512, %s188, [#allocation6], 128, 128, 8
        $region16: #{tpu_custom_call.1} parent=11 // pred_fallthru
          _
        // Predicated region
        $region17: #{tpu_custom_call.1} parent=11 // pred_check
          %p194 = pneg %p136
        $region18: #{tpu_custom_call.1} parent=11 // pred_check_branch
          %196 = sbr.rel (%p194) target = $region20
        $region19: #{tpu_custom_call.1} parent=11 // pred_region
          _
        $region20: #{tpu_custom_call.1} parent=11 // pred_fallthru
          _
      $region12: #{tpu_custom_call.1} parent=5 // pred_fallthru
        _
      %p197 = scmp.lt.s32.totalorder %s19, 2
      // Predicated region
      $region21: #{tpu_custom_call.1} parent=5 // pred_check
        %p198 = pneg %p197
      $region22: #{tpu_custom_call.1} parent=5 // pred_check_branch
        %200 = sbr.rel (%p198) target = $region24
      $region23: #{tpu_custom_call.1} parent=5 // pred_region
        // Predicated region
        $region25: #{tpu_custom_call.1} parent=23 // pred_check
          %p201 = pneg %p60
        $region26: #{tpu_custom_call.1} parent=23 // pred_check_branch
          %203 = sbr.rel (%p201) target = $region28
        $region27: #{tpu_custom_call.1} parent=23 // pred_region
          %s204 = sand.u32 %s50, 1
          %s205 = scalar_lea.sflag [#allocation3], %s204
          %s206 = sand.u32 %s50, 1
          %s207 = smul.addr %s206, 8
          %s208 = scalar_lea.vmem [#allocation2], %s207
          %s210 = ssub.s32 128, 128
          %211 = vsyncadd %s205, %s210
          %s212 = sadd.s32 %s27, %s26
          %s213 = smul.addr %s212, 128
          %s214 = scalar_lea.hbm %s0, %s213
          %s216 = sshll.u32 %s208, 4
          %s217 = int_to_ptr.vmem [resolvable:$true] %s216
          %219 = dma.hbm_to_vmem [thread:$0]  %s214, 128, %s217, %s205
        $region28: #{tpu_custom_call.1} parent=23 // pred_fallthru
          _
        // Predicated region
        $region29: #{tpu_custom_call.1} parent=23 // pred_check
          %p220 = pneg %p88
        $region30: #{tpu_custom_call.1} parent=23 // pred_check_branch
          %222 = sbr.rel (%p220) target = $region32
        $region31: #{tpu_custom_call.1} parent=23 // pred_region
          %s223 = sand.u32 %s19, 1
          %s224 = scalar_lea.sflag [#allocation6], %s223
          %s225 = sand.u32 %s78, 1
          %s226 = smul.addr %s225, 8
          %s227 = scalar_lea.vmem [#allocation5], %s226
          %s229 = ssub.s32 128, 128
          %230 = vsyncadd %s224, %s229
          %s231 = sadd.s32 %s28, %s26
          %s232 = smul.addr %s231, 128
          %s233 = scalar_lea.hbm %s1, %s232
          %s235 = sshll.u32 %s227, 4
          %s236 = int_to_ptr.vmem [resolvable:$true] %s235
          %238 = dma.hbm_to_vmem [thread:$0]  %s233, 128, %s236, %s224
        $region32: #{tpu_custom_call.1} parent=23 // pred_fallthru
          _
      $region24: #{tpu_custom_call.1} parent=5 // pred_fallthru
        _
      %p239 = scmp.le.s32.totalorder 1, %s19
      %p240 = scmp.lt.s32.totalorder %s19, 3
      %p241 = pnand %p239, %p240
      %p242 = pneg %p241
      // Predicated region
      $region33: #{tpu_custom_call.1} parent=5 // pred_check
        _
      $region34: #{tpu_custom_call.1} parent=5 // pred_check_branch
        %244 = sbr.rel (%p241) target = $region36
      $region35: #{tpu_custom_call.1} parent=5 // pred_region
        %s245 = ssub.s32 %s19, 1
        %s246 = sand.u32 %s53, 1
        %s247 = scalar_lea.sflag [#allocation3], %s246
        %s248 = sand.u32 %s53, 1
        %s249 = smul.addr %s248, 8
        %s250 = scalar_lea.vmem [#allocation2], %s249
        // Predicated region
        $region37: #{tpu_custom_call.1} parent=35 // pred_check
          %p251 = pneg %p66
        $region38: #{tpu_custom_call.1} parent=35 // pred_check_branch
          %253 = sbr.rel (%p251) target = $region40
        $region39: #{tpu_custom_call.1} parent=35 // pred_region
          %254 = dma.done %s247, 128
        $region40: #{tpu_custom_call.1} parent=35 // pred_fallthru
          _
        %s255 = sand.u32 %s24, 1
        %s256 = scalar_lea.sflag [#allocation6], %s255
        %s257 = sand.u32 %s81, 1
        %s258 = smul.addr %s257, 8
        %s259 = scalar_lea.vmem [#allocation5], %s258
        // Predicated region
        $region41: #{tpu_custom_call.1} parent=35 // pred_check
          %p260 = pneg %p94
        $region42: #{tpu_custom_call.1} parent=35 // pred_check_branch
          %262 = sbr.rel (%p260) target = $region44
        $region43: #{tpu_custom_call.1} parent=35 // pred_region
          %263 = dma.done %s256, 128
        $region44: #{tpu_custom_call.1} parent=35 // pred_fallthru
          _
        // Predicated region
        $region45: #{tpu_custom_call.1} parent=35 // pred_check
          %p264 = pneg %p115
        $region46: #{tpu_custom_call.1} parent=35 // pred_check_branch
          %266 = sbr.rel (%p264) target = $region48
        $region47: #{tpu_custom_call.1} parent=35 // pred_region
          %267 = dma.done [#allocation6], 512
        $region48: #{tpu_custom_call.1} parent=35 // pred_fallthru
          _
        %s268 = sand.u32 %s53, 1
        %s269 = scalar_lea.sflag [#allocation3], %s268
        %s270 = sand.u32 %s53, 1
        %s271 = smul.addr %s270, 8
        %s272 = scalar_lea.vmem [#allocation2], %s271
        %p273 = pneg %p66
        %p274 = pneg %p63
        %s275 = sand.u32 %s24, 1
        %s276 = scalar_lea.sflag [#allocation6], %s275
        %s277 = sand.u32 %s81, 1
        %s278 = smul.addr %s277, 8
        %s279 = scalar_lea.vmem [#allocation5], %s278
        %p280 = pneg %p94
        %p281 = pneg %p91
        %p282 = pneg %p115
        %p283 = pneg %p112
        %p284 = pneg %p136
        %p285 = pneg %p133
        %p286 = pneg %p166
        %p287 = pneg %p163
        %s288 = sand.u32 %s153, 1
        %s289 = scalar_lea.sflag [#allocation4], %s288
        %s290 = sand.u32 %s153, 1
        %s291 = smul.addr %s290, 64
        %s292 = scalar_lea.vmem [#allocation8], %s291
        %s293 = smul.u32 8, %s30
        %v294 = vld [vmem:[%s250] sm:$0xff]
        %v295 = vld [vmem:[%s259] sm:$0xff]
        %v296 = vld [vmem:[#allocation7] sm:$0xff]
        %v297 = vld [vmem:[#allocation7 + $0x8] sm:$0xff]
        %v298 = vld [vmem:[#allocation7 + $0x10] sm:$0xff]
        %v299 = vld [vmem:[#allocation7 + $0x18] sm:$0xff]
        %v300 = vld [vmem:[%s3] sm:$0x1]
        %v302 = vcombine.high %v294, %v294
        %v304 = vunpack.c.l.s4 1966171168
        %v305 = vunpack.c.0.s8 %v304
        %v306 = vlaneseq
        %v307 = vshrl.u32 %v306, 7
        %v308 = vsub.s32 %v305, %v307
        %v309 = vrot.slane %v294, %v308
        %v311 = vunpack.c.l.s4 1966171168
        %v312 = vunpack.c.0.s8 %v311
        %v313 = vlaneseq
        %v314 = vshrl.u32 %v313, 7
        %v315 = vsub.s32 %v312, %v314
        %v316 = vrot.slane %v302, %v315
        %v317 = vcombine.high %v309, %v309
        %v318 = vcombine.high %v316, %v316
        %v320 = vunpack.c.l.s4 1966171168
        %v321 = vunpack.c.0.s8 %v320
        %v322 = vlaneseq
        %v323 = vshrl.u32 %v322, 7
        %v324 = vsub.s32 %v321, %v323
        %v325 = vrot.slane %v309, %v324
        %v327 = vunpack.c.l.s4 1966171168
        %v328 = vunpack.c.0.s8 %v327
        %v329 = vlaneseq
        %v330 = vshrl.u32 %v329, 7
        %v331 = vsub.s32 %v328, %v330
        %v332 = vrot.slane %v316, %v331
        %v334 = vunpack.c.l.s4 1966171168
        %v335 = vunpack.c.0.s8 %v334
        %v336 = vlaneseq
        %v337 = vshrl.u32 %v336, 7
        %v338 = vsub.s32 %v335, %v337
        %v339 = vrot.slane %v317, %v338
        %v341 = vunpack.c.l.s4 1966171168
        %v342 = vunpack.c.0.s8 %v341
        %v343 = vlaneseq
        %v344 = vshrl.u32 %v343, 7
        %v345 = vsub.s32 %v342, %v344
        %v346 = vrot.slane %v318, %v345
        %v347 = vcombine.high %v325, %v325
        %v348 = vcombine.high %v332, %v332
        %v349 = vcombine.high %v339, %v339
        %v350 = vcombine.high %v346, %v346
        %v351 = vlaneseq
        %v352 = vshrl.u32 %v351, 7
        %v353 = vsub.s32 0, %v352
        %v354 = vrot.slane %v325, %v353
        %v355 = vlaneseq
        %v356 = vshrl.u32 %v355, 7
        %v357 = vsub.s32 0, %v356
        %v358 = vrot.slane %v339, %v357
        %v359 = vlaneseq
        %v360 = vshrl.u32 %v359, 7
        %v361 = vsub.s32 0, %v360
        %v362 = vrot.slane %v347, %v361
        %v363 = vlaneseq
        %v364 = vshrl.u32 %v363, 7
        %v365 = vsub.s32 0, %v364
        %v366 = vrot.slane %v349, %v365
        %v367 = vlaneseq
        %v368 = vshrl.u32 %v367, 7
        %v369 = vsub.s32 0, %v368
        %v370 = vrot.slane %v332, %v369
        %v371 = vlaneseq
        %v372 = vshrl.u32 %v371, 7
        %v373 = vsub.s32 0, %v372
        %v374 = vrot.slane %v346, %v373
        %v375 = vlaneseq
        %v376 = vshrl.u32 %v375, 7
        %v377 = vsub.s32 0, %v376
        %v378 = vrot.slane %v348, %v377
        %v379 = vlaneseq
        %v380 = vshrl.u32 %v379, 7
        %v381 = vsub.s32 0, %v380
        %v382 = vrot.slane %v350, %v381
        %v391 = vmul.f32 %v354, %v295
        %v392 = vmul.f32 %v358, %v295
        %v393 = vmul.f32 %v362, %v295
        %v394 = vmul.f32 %v366, %v295
        %v395 = vmul.f32 %v370, %v295
        %v396 = vmul.f32 %v374, %v295
        %v397 = vmul.f32 %v378, %v295
        %v398 = vmul.f32 %v382, %v295
        %v400 = vlaneseq
        %v401 = vshrl.u32 %v400, 7
        %v402 = vsub.s32 0, %v401
        %v403 = vrot.slane %v300, %v402
        %vm405 = vcmask 261120
        %v407 = vsel %vm405, %v391, 0
        %v410 = vsel %vm405, %v392, 0
        %v413 = vsel %vm405, %v393, 0
        %v416 = vsel %vm405, %v394, 0
        %v419 = vsel %vm405, %v395, 0
        %v422 = vsel %vm405, %v396, 0
        %v425 = vsel %vm405, %v397, 0
        %v428 = vsel %vm405, %v398, 0
        %430 = vmatprep.subr.mxu0 0.0
        %431 = vmatpush1.msra.mxu0 0.0
        %432 = vmatprep.subr.mxu0 0.0
        %433 = vmatpush1.msra.mxu0 0.0
        %434 = vmatprep.subr.mxu0 0.0
        %435 = vmatpush1.msra.mxu0 0.0
        %436 = vmatprep.subr.mxu0 0.0
        %437 = vmatpush1.msra.mxu0 0.0
        %438 = vmatprep.subr.mxu0 0.0
        %439 = vmatpush1.msra.mxu0 0.0
        %440 = vmatprep.subr.mxu0 0.0
        %441 = vmatpush1.msra.mxu0 0.0
        %442 = vmatprep.subr.mxu0 0.0
        %443 = vmatpush1.msra.mxu0 0.0
        %444 = vmatprep.subr.mxu0 0.0
        %445 = vmatpush1.msra.mxu0 0.0
        %446 = vmatprep.subr.mxu0 0.0
        %447 = vmatpush1.msra.mxu0 0.0
        %448 = vmatprep.subr.mxu0 0.0
        %449 = vmatpush1.msra.mxu0 0.0
        %450 = vmatprep.subr.mxu0 0.0
        %451 = vmatpush1.msra.mxu0 0.0
        %452 = vmatprep.subr.mxu0 0.0
        %453 = vmatpush1.msra.mxu0 0.0
        %454 = vmatprep.subr.mxu0 0.0
        %455 = vmatpush1.msra.mxu0 %v299
        %456 = vmatprep.subr.mxu0 0.0
        %457 = vmatpush1.msra.mxu0 %v298
        %458 = vmatprep.subr.mxu0 0.0
        %459 = vmatpush1.msra.mxu0 %v297
        %460 = vmatprep.subr.mxu0 0.0
        %461 = vmatpush1.msra.mxu0 %v296
        %462 = vmatprep.subr.mxu0 0.0
        %463 = vmatpush2.msra.mxu0 0.0
        %464 = vmatprep.subr.mxu0 0.0
        %465 = vmatpush2.msra.mxu0 0.0
        %466 = vmatprep.subr.mxu0 0.0
        %467 = vmatpush2.msra.mxu0 0.0
        %468 = vmatprep.subr.mxu0 0.0
        %469 = vmatpush2.msra.mxu0 0.0
        %470 = vmatprep.subr.mxu0 0.0
        %471 = vmatpush2.msra.mxu0 0.0
        %472 = vmatprep.subr.mxu0 0.0
        %473 = vmatpush2.msra.mxu0 0.0
        %474 = vmatprep.subr.mxu0 0.0
        %475 = vmatpush2.msra.mxu0 0.0
        %476 = vmatprep.subr.mxu0 0.0
        %477 = vmatpush2.msra.mxu0 0.0
        %478 = vmatprep.subr.mxu0 0.0
        %479 = vmatpush2.msra.mxu0 0.0
        %480 = vmatprep.subr.mxu0 0.0
        %481 = vmatpush2.msra.mxu0 0.0
        %482 = vmatprep.subr.mxu0 0.0
        %483 = vmatpush2.msra.mxu0 0.0
        %484 = vmatprep.subr.mxu0 0.0
        %485 = vmatpush2.msra.mxu0 0.0
        %486 = vmatprep.subr.mxu0 0.0
        %487 = vmatpush2.msra.mxu0 0.0
        %488 = vmatprep.subr.mxu0 0.0
        %489 = vmatpush2.msra.mxu0 0.0
        %490 = vmatprep.subr.mxu0 0.0
        %491 = vmatpush2.msra.mxu0 0.0
        %492 = vmatprep.subr.mxu0 0.0
        %493 = vmatpush2.msra.mxu0 0.0
        %494 = vmatprep.mubr.f32.mxu0 0.0
        %495 = vmatmul.mubr.f32.gmra.mxu0 %v407
        %v496 = vpop.f32.mrf.mxu0
        %v497 = vadd.f32 %v403, %v496
        %v498 = vpop.f32.mrf.mxu0
        %499 = vmatprep.mubr.f32.mxu0 0.0
        %500 = vmatmul.mubr.f32.gmra.mxu0 %v410
        %v501 = vpop.f32.mrf.mxu0
        %v502 = vadd.f32 %v403, %v501
        %v503 = vpop.f32.mrf.mxu0
        %504 = vmatprep.mubr.f32.mxu0 0.0
        %505 = vmatmul.mubr.f32.gmra.mxu0 %v413
        %v506 = vpop.f32.mrf.mxu0
        %v507 = vadd.f32 %v403, %v506
        %v508 = vpop.f32.mrf.mxu0
        %509 = vmatprep.mubr.f32.mxu0 0.0
        %510 = vmatmul.mubr.f32.gmra.mxu0 %v416
        %v511 = vpop.f32.mrf.mxu0
        %v512 = vadd.f32 %v403, %v511
        %v513 = vpop.f32.mrf.mxu0
        %514 = vmatprep.mubr.f32.mxu0 0.0
        %515 = vmatmul.mubr.f32.gmra.mxu0 %v419
        %v516 = vpop.f32.mrf.mxu0
        %v517 = vadd.f32 %v403, %v516
        %v518 = vpop.f32.mrf.mxu0
        %519 = vmatprep.mubr.f32.mxu0 0.0
        %520 = vmatmul.mubr.f32.gmra.mxu0 %v422
        %v521 = vpop.f32.mrf.mxu0
        %v522 = vadd.f32 %v403, %v521
        %v523 = vpop.f32.mrf.mxu0
        %524 = vmatprep.mubr.f32.mxu0 0.0
        %525 = vmatmul.mubr.f32.gmra.mxu0 %v425
        %v526 = vpop.f32.mrf.mxu0
        %v527 = vadd.f32 %v403, %v526
        %v528 = vpop.f32.mrf.mxu0
        %529 = vmatprep.mubr.f32.mxu0 0.0
        %530 = vmatmul.mubr.f32.gmra.mxu0 %v428
        %v531 = vpop.f32.mrf.mxu0
        %v532 = vadd.f32 %v403, %v531
        %v533 = vpop.f32.mrf.mxu0
        %534 = vdwg.mxu0
        %535 = vmax.xlane.f32.xlu0 %v497
        %v536 = vpop.xlane.xlu0 %535
        %537 = vmax.xlane.f32.xlu0 %v502
        %v538 = vpop.xlane.xlu0 %537
        %539 = vmax.xlane.f32.xlu0 %v507
        %v540 = vpop.xlane.xlu0 %539
        %541 = vmax.xlane.f32.xlu0 %v512
        %v542 = vpop.xlane.xlu0 %541
        %543 = vmax.xlane.f32.xlu0 %v517
        %v544 = vpop.xlane.xlu0 %543
        %545 = vmax.xlane.f32.xlu0 %v522
        %v546 = vpop.xlane.xlu0 %545
        %547 = vmax.xlane.f32.xlu0 %v527
        %v548 = vpop.xlane.xlu0 %547
        %549 = vmax.xlane.f32.xlu0 %v532
        %v550 = vpop.xlane.xlu0 %549
        %v551 = vsub.f32 %v497, %v536
        %v552 = vsub.f32 %v502, %v538
        %v553 = vsub.f32 %v507, %v540
        %v554 = vsub.f32 %v512, %v542
        %v555 = vsub.f32 %v517, %v544
        %v556 = vsub.f32 %v522, %v546
        %v557 = vsub.f32 %v527, %v548
        %v558 = vsub.f32 %v532, %v550
        %v559 = vmul.f32 %v551, 1.442695
        %v560 = vpow.pop %v559
        %v561 = vmul.f32 %v552, 1.442695
        %v562 = vpow.pop %v561
        %v563 = vmul.f32 %v553, 1.442695
        %v564 = vpow.pop %v563
        %v565 = vmul.f32 %v554, 1.442695
        %v566 = vpow.pop %v565
        %v567 = vmul.f32 %v555, 1.442695
        %v568 = vpow.pop %v567
        %v569 = vmul.f32 %v556, 1.442695
        %v570 = vpow.pop %v569
        %v571 = vmul.f32 %v557, 1.442695
        %v572 = vpow.pop %v571
        %v573 = vmul.f32 %v558, 1.442695
        %v574 = vpow.pop %v573
        %575 = vadd.xlane.f32.xlu0 %v560
        %v576 = vpop.xlane.xlu0 %575
        %577 = vadd.xlane.f32.xlu0 %v562
        %v578 = vpop.xlane.xlu0 %577
        %579 = vadd.xlane.f32.xlu0 %v564
        %v580 = vpop.xlane.xlu0 %579
        %581 = vadd.xlane.f32.xlu0 %v566
        %v582 = vpop.xlane.xlu0 %581
        %583 = vadd.xlane.f32.xlu0 %v568
        %v584 = vpop.xlane.xlu0 %583
        %585 = vadd.xlane.f32.xlu0 %v570
        %v586 = vpop.xlane.xlu0 %585
        %587 = vadd.xlane.f32.xlu0 %v572
        %v588 = vpop.xlane.xlu0 %587
        %589 = vadd.xlane.f32.xlu0 %v574
        %v590 = vpop.xlane.xlu0 %589
        %v591 = vrcp.pop %v576
        %v592 = vmul.f32 %v560, %v591
        %v593 = vrcp.pop %v578
        %v594 = vmul.f32 %v562, %v593
        %v595 = vrcp.pop %v580
        %v596 = vmul.f32 %v564, %v595
        %v597 = vrcp.pop %v582
        %v598 = vmul.f32 %v566, %v597
        %v599 = vrcp.pop %v584
        %v600 = vmul.f32 %v568, %v599
        %v601 = vrcp.pop %v586
        %v602 = vmul.f32 %v570, %v601
        %v603 = vrcp.pop %v588
        %v604 = vmul.f32 %v572, %v603
        %v605 = vrcp.pop %v590
        %v606 = vmul.f32 %v574, %v605
        %vm607 = vcmask 130048
        %608 = vst.msk [vmem:[%s292] sm:$0xff] %vm607, %v592
        %609 = vst.msk [vmem:[%s292 + $0x8] sm:$0xff] %vm607, %v594
        %610 = vst.msk [vmem:[%s292 + $0x10] sm:$0xff] %vm607, %v596
        %611 = vst.msk [vmem:[%s292 + $0x18] sm:$0xff] %vm607, %v598
        %612 = vst.msk [vmem:[%s292 + $0x20] sm:$0xff] %vm607, %v600
        %613 = vst.msk [vmem:[%s292 + $0x28] sm:$0xff] %vm607, %v602
        %614 = vst.msk [vmem:[%s292 + $0x30] sm:$0xff] %vm607, %v604
        %615 = vst.msk [vmem:[%s292 + $0x38] sm:$0xff] %vm607, %v606
        %s616 = sand.u32 %s153, 1
        %s617 = scalar_lea.sflag [#allocation4], %s616
        %s618 = sand.u32 %s153, 1
        %s619 = smul.addr %s618, 64
        %s620 = scalar_lea.vmem [#allocation8], %s619
        // Predicated region
        $region49: #{tpu_custom_call.1} parent=35 // pred_check
          %p621 = pneg %p163
        $region50: #{tpu_custom_call.1} parent=35 // pred_check_branch
          %623 = sbr.rel (%p621) target = $region52
        $region51: #{tpu_custom_call.1} parent=35 // pred_region
          %s624 = smul.u32 8, %s30
          %s626 = ssub.s32 1024, 1024
          %627 = vsyncadd %s617, %s626
          %s628 = sadd.s32 %s31, %s624
          %s629 = smul.addr %s29, 8
          %s630 = sadd.s32 %s628, %s629
          %s631 = smul.addr %s630, 128
          %s632 = scalar_lea.hbm %s4, %s631
          %s633 = sshll.u32 %s620, 4
          %s634 = int_to_ptr.vmem [resolvable:$true] %s633
          %639 = dma.vmem_to_hbm [thread:$0]  %s634, 1024, %s632, %s617, 128, 128, 8
        $region52: #{tpu_custom_call.1} parent=35 // pred_fallthru
          _
      $region36: #{tpu_custom_call.1} parent=5 // pred_fallthru
        _
      %p640 = scmp.le.s32.totalorder 2, %s19
      // Predicated region
      $region53: #{tpu_custom_call.1} parent=5 // pred_check
        %p641 = pneg %p640
      $region54: #{tpu_custom_call.1} parent=5 // pred_check_branch
        %643 = sbr.rel (%p641) target = $region56
      $region55: #{tpu_custom_call.1} parent=5 // pred_region
        %s644 = ssub.s32 %s19, 2
        // Predicated region
        $region57: #{tpu_custom_call.1} parent=55 // pred_check
          %p645 = pneg %p169
        $region58: #{tpu_custom_call.1} parent=55 // pred_check_branch
          %647 = sbr.rel (%p645) target = $region60
        $region59: #{tpu_custom_call.1} parent=55 // pred_region
          %s648 = sand.u32 %s154, 1
          %s649 = scalar_lea.sflag [#allocation4], %s648
          %s650 = sand.u32 %s154, 1
          %s651 = smul.addr %s650, 64
          %s652 = scalar_lea.vmem [#allocation8], %s651
          %653 = dma.done %s649, 1024
        $region60: #{tpu_custom_call.1} parent=55 // pred_fallthru
          _
      $region56: #{tpu_custom_call.1} parent=5 // pred_fallthru
        _
    $region6: #{tpu_custom_call.1} parent=1 // loop_footer
      %s23 = sadd.s32 1, %s19
    $region7: #{tpu_custom_call.1} parent=1 // loop_footer_branch
      %18 = sbr.rel target = $region3
    $region8: #{tpu_custom_call.1} parent=1 // loop_exit
      _
    %654 = vsyncpa [#allocation3], 1
    %s655 = scalar_lea.sflag [#allocation3], 1
    %656 = vsyncpa %s655, 1
    %657 = vsyncpa [#allocation6], 1
    %s658 = scalar_lea.sflag [#allocation6], 1
    %659 = vsyncpa %s658, 1
    %660 = vsyncpa [#allocation4], 1
    %s661 = scalar_lea.sflag [#allocation4], 1
    %662 = vsyncpa %s661, 1

</llo_original>
